<compile_context>
chip_gen: v7x
topology: tpu7x:2x2x1
jax: 0.10.0
libtpu: 0.0.40
codegen_flags: <defaults>
</compile_context>

<pallas_src>
import math
import functools

import jax
import jax.numpy as jnp
from jax.experimental import pallas as pl

# ----------------------------- config -----------------------------
D_MODEL = 32
NHEAD = 4
DIM_FF = 64
NUM_LAYERS = 1
LN_EPS = 1e-5
HEAD_DIM = D_MODEL // NHEAD


def _layer_norm(x, w, b):
    # x: (M, D), w/b: (1, D); biased variance, matches torch.nn.LayerNorm
    mu = jnp.mean(x, axis=-1, keepdims=True)
    xc = x - mu
    var = jnp.mean(xc * xc, axis=-1, keepdims=True)
    return xc * jax.lax.rsqrt(var + LN_EPS) * w + b


def transformer_kernel(x_ref, bias_ref, *refs, num_layers):
    """All encoder layers fused; activations stay in VMEM/vregs.

    refs = 12 pre-transposed params per layer, then the output ref.
      per layer: wqkv (D,3D), bqkv (1,3D), wo (D,D), bo (1,D),
                 w1 (D,FF), b1 (1,FF), w2 (FF,D), b2 (1,D),
                 ln1_w, ln1_b, ln2_w, ln2_b (all (1,D))
    """
    o_ref = refs[-1]
    params = refs[:-1]

    x = x_ref[...].astype(jnp.float32)          # (M, D)
    bias = bias_ref[...]                        # (M, M) additive mask: 0 / -1e30
    scale = 1.0 / math.sqrt(HEAD_DIM)

    for l in range(num_layers):                 # static unroll (NUM_LAYERS small)
        (wqkv, bqkv, wo, bo, w1, b1, w2, b2,
         ln1w, ln1b, ln2w, ln2b) = params[12 * l: 12 * (l + 1)]

        # ---- fused QKV projection:  (M, D) @ (D, 3D) ----
        qkv = jnp.dot(x, wqkv[...],
                      preferred_element_type=jnp.float32) + bqkv[...]   # (M, 3D)

        # ---- multi-head self-attention (out-projection folded per head) ----
        wo_t = wo[...]                                                  # (D, D)
        attn = jnp.zeros_like(x) + bo[...]                              # start w/ bias
        for h in range(NHEAD):                                          # static unroll
            q_lo = h * HEAD_DIM
            k_lo = D_MODEL + h * HEAD_DIM
            v_lo = 2 * D_MODEL + h * HEAD_DIM
            qh = qkv[:, q_lo:q_lo + HEAD_DIM]                           # (M, hd)
            kh = qkv[:, k_lo:k_lo + HEAD_DIM]
            vh = qkv[:, v_lo:v_lo + HEAD_DIM]

            # scores over the flat slab + block-diagonal bias (no cross-batch attn)
            s = jnp.einsum("md,nd->mn", qh, kh,
                           preferred_element_type=jnp.float32) * scale + bias
            s = s - jnp.max(s, axis=-1, keepdims=True)
            p = jnp.exp(s)
            p = p * pl.reciprocal(jnp.sum(p, axis=-1, keepdims=True), approx=True)

            oh = jnp.dot(p, vh, preferred_element_type=jnp.float32)     # (M, hd)
            # fold output projection: concat_h(oh) @ Wo^T == sum_h oh @ Wo^T[h-rows]
            attn = attn + jnp.dot(oh, wo_t[q_lo:q_lo + HEAD_DIM, :],
                                  preferred_element_type=jnp.float32)

        # residual + layernorm1 (post-norm; dropout = identity in eval mode)
        x1 = _layer_norm(x + attn, ln1w[...], ln1b[...])

        # ---- feed-forward ----
        h1 = jnp.dot(x1, w1[...], preferred_element_type=jnp.float32) + b1[...]
        h1 = jnp.maximum(h1, 0.0)                                       # ReLU
        h2 = jnp.dot(h1, w2[...], preferred_element_type=jnp.float32) + b2[...]

        # residual + layernorm2
        x = _layer_norm(x1 + h2, ln2w[...], ln2b[...])

    o_ref[...] = x.astype(o_ref.dtype)


def _full_spec(shape):
    n = len(shape)
    return pl.BlockSpec(shape, lambda *_: (0,) * n)


def transformer_forward(x, layer_params_list):
    """Equivalent to: self.transformer(input.transpose(0,1)).transpose(0,1).

    x: (B, S, D) float32.  All layers fused into one pallas_call.
    """
    B, S, D = x.shape
    M = B * S
    num_layers = len(layer_params_list)

    # Pre-transpose all weights ONCE outside the kernel (nn.Linear: (out, in)).
    flat_params = []
    for p in layer_params_list:
        flat_params += [
            p["wqkv"].T, p["bqkv"],          # (D, 3D), (1, 3D)
            p["wo"].T, p["bo"],              # (D, D),  (1, D)
            p["w1"].T, p["b1"],              # (D, FF), (1, FF)
            p["w2"].T, p["b2"],              # (FF, D), (1, D)
            p["ln1_w"], p["ln1_b"], p["ln2_w"], p["ln2_b"],
        ]

    # Block-diagonal additive attention bias (keeps batch elements independent
    # while attention runs on the flat (M, M) score matrix).
    bid = jnp.arange(M, dtype=jnp.int32) // S
    attn_bias = jnp.where(bid[:, None] == bid[None, :],
                          jnp.float32(0.0), jnp.float32(-1e30))

    kernel = functools.partial(transformer_kernel, num_layers=num_layers)

    in_specs = [_full_spec((M, D)), _full_spec((M, M))]
    in_specs += [_full_spec(p.shape) for p in flat_params]

    out = pl.pallas_call(
        kernel,
        out_shape=jax.ShapeDtypeStruct((M, D), x.dtype),
        in_specs=in_specs,
        out_specs=_full_spec((M, D)),
    )(x.reshape(M, D), attn_bias, *flat_params)

    return out.reshape(B, S, D)


# ------------------------ reference (plain JAX) ------------------------
def _ref_layer(x, p):
    def ln(v, w, b):
        mu = v.mean(-1, keepdims=True)
        var = ((v - mu) ** 2).mean(-1, keepdims=True)
        return (v - mu) / jnp.sqrt(var + LN_EPS) * w + b

    B, S, D = x.shape
    qkv = x @ p["wqkv"].T + p["bqkv"][0]
    q, k, v = qkv[..., :D], qkv[..., D:2 * D], qkv[..., 2 * D:]
    qh = q.reshape(B, S, NHEAD, HEAD_DIM).transpose(0, 2, 1, 3)
    kh = k.reshape(B, S, NHEAD, HEAD_DIM).transpose(0, 2, 1, 3)
    vh = v.reshape(B, S, NHEAD, HEAD_DIM).transpose(0, 2, 1, 3)
    s = jnp.einsum("bhqd,bhkd->bhqk", qh, kh) / math.sqrt(HEAD_DIM)
    pr = jax.nn.softmax(s, axis=-1)
    a = jnp.einsum("bhqk,bhkd->bhqd", pr, vh).transpose(0, 2, 1, 3).reshape(B, S, D)
    a = a @ p["wo"].T + p["bo"][0]
    x1 = ln(x + a, p["ln1_w"][0], p["ln1_b"][0])
    h = jnp.maximum(x1 @ p["w1"].T + p["b1"][0], 0.0)
    h = h @ p["w2"].T + p["b2"][0]
    return ln(x1 + h, p["ln2_w"][0], p["ln2_b"][0])


def make_layer_params(key):
    ks = jax.random.split(key, 8)
    scale = 0.05
    return {
        "wqkv": scale * jax.random.normal(ks[0], (3 * D_MODEL, D_MODEL), jnp.float32),
        "bqkv": scale * jax.random.normal(ks[1], (1, 3 * D_MODEL), jnp.float32),
        "wo":   scale * jax.random.normal(ks[2], (D_MODEL, D_MODEL), jnp.float32),
        "bo":   scale * jax.random.normal(ks[3], (1, D_MODEL), jnp.float32),
        "w1":   scale * jax.random.normal(ks[4], (DIM_FF, D_MODEL), jnp.float32),
        "b1":   scale * jax.random.normal(ks[5], (1, DIM_FF), jnp.float32),
        "w2":   scale * jax.random.normal(ks[6], (D_MODEL, DIM_FF), jnp.float32),
        "b2":   scale * jax.random.normal(ks[7], (1, D_MODEL), jnp.float32),
        "ln1_w": jnp.ones((1, D_MODEL), jnp.float32),
        "ln1_b": jnp.zeros((1, D_MODEL), jnp.float32),
        "ln2_w": jnp.ones((1, D_MODEL), jnp.float32),
        "ln2_b": jnp.zeros((1, D_MODEL), jnp.float32),
    }


if __name__ == "__main__":
    key = jax.random.PRNGKey(0)
    k_x, k_p = jax.random.split(key)

    B, S = 2, 8
    x = jax.random.normal(k_x, (B, S, D_MODEL), jnp.float32)   # (batch, seq, d_model)

    layer_params = [make_layer_params(jax.random.fold_in(k_p, i))
                    for i in range(NUM_LAYERS)]

    fwd = jax.jit(transformer_forward)
    out = fwd(x, layer_params)
    out = jax.block_until_ready(out)

    # sanity check against a plain-JAX reference of the same math
    ref = x
    for p in layer_params:
        ref = _ref_layer(ref, p)
    assert out.shape == (B, S, D_MODEL)
    assert jnp.max(jnp.abs(out - ref)) < 2e-3

    print("KERNEL_OK")
</pallas_src>

<mosaic_0001>
module attributes {stable_mosaic.version = 11 : i64} {
  func.func @transformer_kernel(%arg0: memref<16x32xf32, #tpu.memory_space<vmem>>, %arg1: memref<16x16xf32, #tpu.memory_space<vmem>>, %arg2: memref<32x96xf32, #tpu.memory_space<vmem>>, %arg3: memref<1x96xf32, #tpu.memory_space<vmem>>, %arg4: memref<32x32xf32, #tpu.memory_space<vmem>>, %arg5: memref<1x32xf32, #tpu.memory_space<vmem>>, %arg6: memref<32x64xf32, #tpu.memory_space<vmem>>, %arg7: memref<1x64xf32, #tpu.memory_space<vmem>>, %arg8: memref<64x32xf32, #tpu.memory_space<vmem>>, %arg9: memref<1x32xf32, #tpu.memory_space<vmem>>, %arg10: memref<1x32xf32, #tpu.memory_space<vmem>>, %arg11: memref<1x32xf32, #tpu.memory_space<vmem>>, %arg12: memref<1x32xf32, #tpu.memory_space<vmem>>, %arg13: memref<1x32xf32, #tpu.memory_space<vmem>>, %arg14: memref<16x32xf32, #tpu.memory_space<vmem>>) attributes {dimension_semantics = [], scalar_prefetch = 0 : i64, scratch_operands = 0 : i64, tpu.core_type = #tpu.core_type<tc>} {
    %c0 = arith.constant 0 : index
    %c0_0 = arith.constant 0 : index
    %0 = vector.load %arg0[%c0, %c0_0] : memref<16x32xf32, #tpu.memory_space<vmem>>, vector<16x32xf32>
    %c0_1 = arith.constant 0 : index
    %c0_2 = arith.constant 0 : index
    %1 = vector.load %arg1[%c0_1, %c0_2] : memref<16x16xf32, #tpu.memory_space<vmem>>, vector<16x16xf32>
    %c0_3 = arith.constant 0 : index
    %c0_4 = arith.constant 0 : index
    %2 = vector.load %arg2[%c0_3, %c0_4] : memref<32x96xf32, #tpu.memory_space<vmem>>, vector<32x96xf32>
    %cst = arith.constant dense<0.000000e+00> : vector<16x96xf32>
    %3 = tpu.matmul %0, %2, %cst {dimension_numbers = #tpu.dot_dimension_numbers<[1], [0], [0], [1], [0, 0, 1, 1], [], []>} : vector<16x32xf32>, vector<32x96xf32>, vector<16x96xf32> -> vector<16x96xf32>
    %c0_5 = arith.constant 0 : index
    %c0_6 = arith.constant 0 : index
    %4 = vector.load %arg3[%c0_5, %c0_6] : memref<1x96xf32, #tpu.memory_space<vmem>>, vector<1x96xf32>
    %5 = vector.broadcast %4 : vector<1x96xf32> to vector<16x96xf32>
    %6 = arith.addf %3, %5 : vector<16x96xf32>
    %c0_7 = arith.constant 0 : index
    %c0_8 = arith.constant 0 : index
    %7 = vector.load %arg4[%c0_7, %c0_8] : memref<32x32xf32, #tpu.memory_space<vmem>>, vector<32x32xf32>
    %cst_9 = arith.constant 0.000000e+00 : f32
    %8 = vector.broadcast %cst_9 : f32 to vector<16x32xf32>
    %c0_10 = arith.constant 0 : index
    %c0_11 = arith.constant 0 : index
    %9 = vector.load %arg5[%c0_10, %c0_11] : memref<1x32xf32, #tpu.memory_space<vmem>>, vector<1x32xf32>
    %10 = vector.broadcast %9 : vector<1x32xf32> to vector<16x32xf32>
    %11 = arith.addf %8, %10 : vector<16x32xf32>
    %12 = vector.extract_strided_slice %6 {offsets = [0, 0], sizes = [16, 8], strides = [1, 1]} : vector<16x96xf32> to vector<16x8xf32>
    %13 = vector.extract_strided_slice %6 {offsets = [0, 32], sizes = [16, 8], strides = [1, 1]} : vector<16x96xf32> to vector<16x8xf32>
    %14 = vector.extract_strided_slice %6 {offsets = [0, 64], sizes = [16, 8], strides = [1, 1]} : vector<16x96xf32> to vector<16x8xf32>
    "tpu.trace_start"() <{level = 10 : i32, message = "md,nd->mn"}> : () -> ()
    %cst_12 = arith.constant dense<0.000000e+00> : vector<16x16xf32>
    %15 = tpu.matmul %12, %13, %cst_12 {dimension_numbers = #tpu.dot_dimension_numbers<[1], [1], [0], [0], [0, 0, 1, 0], [], []>} : vector<16x8xf32>, vector<16x8xf32>, vector<16x16xf32> -> vector<16x16xf32>
    "tpu.trace_stop"() : () -> ()
    %cst_13 = arith.constant 0.353553385 : f32
    %16 = vector.broadcast %cst_13 : f32 to vector<16x16xf32>
    %17 = arith.mulf %15, %16 : vector<16x16xf32>
    %18 = arith.addf %17, %1 : vector<16x16xf32>
    %cst_14 = arith.constant dense<0xFF800000> : vector<16xf32>
    %19 = vector.multi_reduction <maximumf>, %18, %cst_14 [1] : vector<16x16xf32> to vector<16xf32>
    %20 = vector.shape_cast %19 : vector<16xf32> to vector<16x1xf32>
    %21 = vector.broadcast %20 : vector<16x1xf32> to vector<16x16xf32>
    %22 = arith.subf %18, %21 : vector<16x16xf32>
    %23 = math.exp %22 : vector<16x16xf32>
    %cst_15 = arith.constant dense<0.000000e+00> : vector<16xf32>
    %24 = vector.multi_reduction <add>, %23, %cst_15 [1] : vector<16x16xf32> to vector<16xf32>
    %25 = vector.shape_cast %24 : vector<16xf32> to vector<16x1xf32>
    %26 = tpu.reciprocal %25 {approx = true} : vector<16x1xf32> -> vector<16x1xf32>
    %27 = vector.broadcast %26 : vector<16x1xf32> to vector<16x16xf32>
    %28 = arith.mulf %23, %27 : vector<16x16xf32>
    %cst_16 = arith.constant dense<0.000000e+00> : vector<16x8xf32>
    %29 = tpu.matmul %28, %14, %cst_16 {dimension_numbers = #tpu.dot_dimension_numbers<[1], [0], [0], [1], [0, 0, 1, 1], [], []>} : vector<16x16xf32>, vector<16x8xf32>, vector<16x8xf32> -> vector<16x8xf32>
    %30 = vector.extract_strided_slice %7 {offsets = [0, 0], sizes = [8, 32], strides = [1, 1]} : vector<32x32xf32> to vector<8x32xf32>
    %cst_17 = arith.constant dense<0.000000e+00> : vector<16x32xf32>
    %31 = tpu.matmul %29, %30, %cst_17 {dimension_numbers = #tpu.dot_dimension_numbers<[1], [0], [0], [1], [0, 0, 1, 1], [], []>} : vector<16x8xf32>, vector<8x32xf32>, vector<16x32xf32> -> vector<16x32xf32>
    %32 = arith.addf %11, %31 : vector<16x32xf32>
    %33 = vector.extract_strided_slice %6 {offsets = [0, 8], sizes = [16, 8], strides = [1, 1]} : vector<16x96xf32> to vector<16x8xf32>
    %34 = vector.extract_strided_slice %6 {offsets = [0, 40], sizes = [16, 8], strides = [1, 1]} : vector<16x96xf32> to vector<16x8xf32>
    %35 = vector.extract_strided_slice %6 {offsets = [0, 72], sizes = [16, 8], strides = [1, 1]} : vector<16x96xf32> to vector<16x8xf32>
    "tpu.trace_start"() <{level = 10 : i32, message = "md,nd->mn"}> : () -> ()
    %cst_18 = arith.constant dense<0.000000e+00> : vector<16x16xf32>
    %36 = tpu.matmul %33, %34, %cst_18 {dimension_numbers = #tpu.dot_dimension_numbers<[1], [1], [0], [0], [0, 0, 1, 0], [], []>} : vector<16x8xf32>, vector<16x8xf32>, vector<16x16xf32> -> vector<16x16xf32>
    "tpu.trace_stop"() : () -> ()
    %cst_19 = arith.constant 0.353553385 : f32
    %37 = vector.broadcast %cst_19 : f32 to vector<16x16xf32>
    %38 = arith.mulf %36, %37 : vector<16x16xf32>
    %39 = arith.addf %38, %1 : vector<16x16xf32>
    %cst_20 = arith.constant dense<0xFF800000> : vector<16xf32>
    %40 = vector.multi_reduction <maximumf>, %39, %cst_20 [1] : vector<16x16xf32> to vector<16xf32>
    %41 = vector.shape_cast %40 : vector<16xf32> to vector<16x1xf32>
    %42 = vector.broadcast %41 : vector<16x1xf32> to vector<16x16xf32>
    %43 = arith.subf %39, %42 : vector<16x16xf32>
    %44 = math.exp %43 : vector<16x16xf32>
    %cst_21 = arith.constant dense<0.000000e+00> : vector<16xf32>
    %45 = vector.multi_reduction <add>, %44, %cst_21 [1] : vector<16x16xf32> to vector<16xf32>
    %46 = vector.shape_cast %45 : vector<16xf32> to vector<16x1xf32>
    %47 = tpu.reciprocal %46 {approx = true} : vector<16x1xf32> -> vector<16x1xf32>
    %48 = vector.broadcast %47 : vector<16x1xf32> to vector<16x16xf32>
    %49 = arith.mulf %44, %48 : vector<16x16xf32>
    %cst_22 = arith.constant dense<0.000000e+00> : vector<16x8xf32>
    %50 = tpu.matmul %49, %35, %cst_22 {dimension_numbers = #tpu.dot_dimension_numbers<[1], [0], [0], [1], [0, 0, 1, 1], [], []>} : vector<16x16xf32>, vector<16x8xf32>, vector<16x8xf32> -> vector<16x8xf32>
    %51 = vector.extract_strided_slice %7 {offsets = [8, 0], sizes = [8, 32], strides = [1, 1]} : vector<32x32xf32> to vector<8x32xf32>
    %cst_23 = arith.constant dense<0.000000e+00> : vector<16x32xf32>
    %52 = tpu.matmul %50, %51, %cst_23 {dimension_numbers = #tpu.dot_dimension_numbers<[1], [0], [0], [1], [0, 0, 1, 1], [], []>} : vector<16x8xf32>, vector<8x32xf32>, vector<16x32xf32> -> vector<16x32xf32>
    %53 = arith.addf %32, %52 : vector<16x32xf32>
    %54 = vector.extract_strided_slice %6 {offsets = [0, 16], sizes = [16, 8], strides = [1, 1]} : vector<16x96xf32> to vector<16x8xf32>
    %55 = vector.extract_strided_slice %6 {offsets = [0, 48], sizes = [16, 8], strides = [1, 1]} : vector<16x96xf32> to vector<16x8xf32>
    %56 = vector.extract_strided_slice %6 {offsets = [0, 80], sizes = [16, 8], strides = [1, 1]} : vector<16x96xf32> to vector<16x8xf32>
    "tpu.trace_start"() <{level = 10 : i32, message = "md,nd->mn"}> : () -> ()
    %cst_24 = arith.constant dense<0.000000e+00> : vector<16x16xf32>
    %57 = tpu.matmul %54, %55, %cst_24 {dimension_numbers = #tpu.dot_dimension_numbers<[1], [1], [0], [0], [0, 0, 1, 0], [], []>} : vector<16x8xf32>, vector<16x8xf32>, vector<16x16xf32> -> vector<16x16xf32>
    "tpu.trace_stop"() : () -> ()
    %cst_25 = arith.constant 0.353553385 : f32
    %58 = vector.broadcast %cst_25 : f32 to vector<16x16xf32>
    %59 = arith.mulf %57, %58 : vector<16x16xf32>
    %60 = arith.addf %59, %1 : vector<16x16xf32>
    %cst_26 = arith.constant dense<0xFF800000> : vector<16xf32>
    %61 = vector.multi_reduction <maximumf>, %60, %cst_26 [1] : vector<16x16xf32> to vector<16xf32>
    %62 = vector.shape_cast %61 : vector<16xf32> to vector<16x1xf32>
    %63 = vector.broadcast %62 : vector<16x1xf32> to vector<16x16xf32>
    %64 = arith.subf %60, %63 : vector<16x16xf32>
    %65 = math.exp %64 : vector<16x16xf32>
    %cst_27 = arith.constant dense<0.000000e+00> : vector<16xf32>
    %66 = vector.multi_reduction <add>, %65, %cst_27 [1] : vector<16x16xf32> to vector<16xf32>
    %67 = vector.shape_cast %66 : vector<16xf32> to vector<16x1xf32>
    %68 = tpu.reciprocal %67 {approx = true} : vector<16x1xf32> -> vector<16x1xf32>
    %69 = vector.broadcast %68 : vector<16x1xf32> to vector<16x16xf32>
    %70 = arith.mulf %65, %69 : vector<16x16xf32>
    %cst_28 = arith.constant dense<0.000000e+00> : vector<16x8xf32>
    %71 = tpu.matmul %70, %56, %cst_28 {dimension_numbers = #tpu.dot_dimension_numbers<[1], [0], [0], [1], [0, 0, 1, 1], [], []>} : vector<16x16xf32>, vector<16x8xf32>, vector<16x8xf32> -> vector<16x8xf32>
    %72 = vector.extract_strided_slice %7 {offsets = [16, 0], sizes = [8, 32], strides = [1, 1]} : vector<32x32xf32> to vector<8x32xf32>
    %cst_29 = arith.constant dense<0.000000e+00> : vector<16x32xf32>
    %73 = tpu.matmul %71, %72, %cst_29 {dimension_numbers = #tpu.dot_dimension_numbers<[1], [0], [0], [1], [0, 0, 1, 1], [], []>} : vector<16x8xf32>, vector<8x32xf32>, vector<16x32xf32> -> vector<16x32xf32>
    %74 = arith.addf %53, %73 : vector<16x32xf32>
    %75 = vector.extract_strided_slice %6 {offsets = [0, 24], sizes = [16, 8], strides = [1, 1]} : vector<16x96xf32> to vector<16x8xf32>
    %76 = vector.extract_strided_slice %6 {offsets = [0, 56], sizes = [16, 8], strides = [1, 1]} : vector<16x96xf32> to vector<16x8xf32>
    %77 = vector.extract_strided_slice %6 {offsets = [0, 88], sizes = [16, 8], strides = [1, 1]} : vector<16x96xf32> to vector<16x8xf32>
    "tpu.trace_start"() <{level = 10 : i32, message = "md,nd->mn"}> : () -> ()
    %cst_30 = arith.constant dense<0.000000e+00> : vector<16x16xf32>
    %78 = tpu.matmul %75, %76, %cst_30 {dimension_numbers = #tpu.dot_dimension_numbers<[1], [1], [0], [0], [0, 0, 1, 0], [], []>} : vector<16x8xf32>, vector<16x8xf32>, vector<16x16xf32> -> vector<16x16xf32>
    "tpu.trace_stop"() : () -> ()
    %cst_31 = arith.constant 0.353553385 : f32
    %79 = vector.broadcast %cst_31 : f32 to vector<16x16xf32>
    %80 = arith.mulf %78, %79 : vector<16x16xf32>
    %81 = arith.addf %80, %1 : vector<16x16xf32>
    %cst_32 = arith.constant dense<0xFF800000> : vector<16xf32>
    %82 = vector.multi_reduction <maximumf>, %81, %cst_32 [1] : vector<16x16xf32> to vector<16xf32>
    %83 = vector.shape_cast %82 : vector<16xf32> to vector<16x1xf32>
    %84 = vector.broadcast %83 : vector<16x1xf32> to vector<16x16xf32>
    %85 = arith.subf %81, %84 : vector<16x16xf32>
    %86 = math.exp %85 : vector<16x16xf32>
    %cst_33 = arith.constant dense<0.000000e+00> : vector<16xf32>
    %87 = vector.multi_reduction <add>, %86, %cst_33 [1] : vector<16x16xf32> to vector<16xf32>
    %88 = vector.shape_cast %87 : vector<16xf32> to vector<16x1xf32>
    %89 = tpu.reciprocal %88 {approx = true} : vector<16x1xf32> -> vector<16x1xf32>
    %90 = vector.broadcast %89 : vector<16x1xf32> to vector<16x16xf32>
    %91 = arith.mulf %86, %90 : vector<16x16xf32>
    %cst_34 = arith.constant dense<0.000000e+00> : vector<16x8xf32>
    %92 = tpu.matmul %91, %77, %cst_34 {dimension_numbers = #tpu.dot_dimension_numbers<[1], [0], [0], [1], [0, 0, 1, 1], [], []>} : vector<16x16xf32>, vector<16x8xf32>, vector<16x8xf32> -> vector<16x8xf32>
    %93 = vector.extract_strided_slice %7 {offsets = [24, 0], sizes = [8, 32], strides = [1, 1]} : vector<32x32xf32> to vector<8x32xf32>
    %cst_35 = arith.constant dense<0.000000e+00> : vector<16x32xf32>
    %94 = tpu.matmul %92, %93, %cst_35 {dimension_numbers = #tpu.dot_dimension_numbers<[1], [0], [0], [1], [0, 0, 1, 1], [], []>} : vector<16x8xf32>, vector<8x32xf32>, vector<16x32xf32> -> vector<16x32xf32>
    %95 = arith.addf %74, %94 : vector<16x32xf32>
    %96 = arith.addf %0, %95 : vector<16x32xf32>
    %c0_36 = arith.constant 0 : index
    %c0_37 = arith.constant 0 : index
    %97 = vector.load %arg10[%c0_36, %c0_37] : memref<1x32xf32, #tpu.memory_space<vmem>>, vector<1x32xf32>
    %c0_38 = arith.constant 0 : index
    %c0_39 = arith.constant 0 : index
    %98 = vector.load %arg11[%c0_38, %c0_39] : memref<1x32xf32, #tpu.memory_space<vmem>>, vector<1x32xf32>
    %cst_40 = arith.constant dense<0.000000e+00> : vector<16xf32>
    %99 = vector.multi_reduction <add>, %96, %cst_40 [1] : vector<16x32xf32> to vector<16xf32>
    %100 = vector.shape_cast %99 : vector<16xf32> to vector<16x1xf32>
    %cst_41 = arith.constant 3.200000e+01 : f32
    %101 = vector.broadcast %cst_41 : f32 to vector<16x1xf32>
    %102 = arith.divf %100, %101 : vector<16x1xf32>
    %103 = vector.broadcast %102 : vector<16x1xf32> to vector<16x32xf32>
    %104 = arith.subf %96, %103 : vector<16x32xf32>
    %105 = arith.mulf %104, %104 : vector<16x32xf32>
    %cst_42 = arith.constant dense<0.000000e+00> : vector<16xf32>
    %106 = vector.multi_reduction <add>, %105, %cst_42 [1] : vector<16x32xf32> to vector<16xf32>
    %107 = vector.shape_cast %106 : vector<16xf32> to vector<16x1xf32>
    %cst_43 = arith.constant 3.200000e+01 : f32
    %108 = vector.broadcast %cst_43 : f32 to vector<16x1xf32>
    %109 = arith.divf %107, %108 : vector<16x1xf32>
    %cst_44 = arith.constant 9.99999974E-6 : f32
    %110 = vector.broadcast %cst_44 : f32 to vector<16x1xf32>
    %111 = arith.addf %109, %110 : vector<16x1xf32>
    %112 = math.rsqrt %111 : vector<16x1xf32>
    %113 = vector.broadcast %112 : vector<16x1xf32> to vector<16x32xf32>
    %114 = arith.mulf %104, %113 : vector<16x32xf32>
    %115 = vector.broadcast %97 : vector<1x32xf32> to vector<16x32xf32>
    %116 = arith.mulf %114, %115 : vector<16x32xf32>
    %117 = vector.broadcast %98 : vector<1x32xf32> to vector<16x32xf32>
    %118 = arith.addf %116, %117 : vector<16x32xf32>
    %c0_45 = arith.constant 0 : index
    %c0_46 = arith.constant 0 : index
    %119 = vector.load %arg6[%c0_45, %c0_46] : memref<32x64xf32, #tpu.memory_space<vmem>>, vector<32x64xf32>
    %cst_47 = arith.constant dense<0.000000e+00> : vector<16x64xf32>
    %120 = tpu.matmul %118, %119, %cst_47 {dimension_numbers = #tpu.dot_dimension_numbers<[1], [0], [0], [1], [0, 0, 1, 1], [], []>} : vector<16x32xf32>, vector<32x64xf32>, vector<16x64xf32> -> vector<16x64xf32>
    %c0_48 = arith.constant 0 : index
    %c0_49 = arith.constant 0 : index
    %121 = vector.load %arg7[%c0_48, %c0_49] : memref<1x64xf32, #tpu.memory_space<vmem>>, vector<1x64xf32>
    %122 = vector.broadcast %121 : vector<1x64xf32> to vector<16x64xf32>
    %123 = arith.addf %120, %122 : vector<16x64xf32>
    %cst_50 = arith.constant 0.000000e+00 : f32
    %124 = vector.broadcast %cst_50 : f32 to vector<16x64xf32>
    %125 = arith.maximumf %123, %124 : vector<16x64xf32>
    %c0_51 = arith.constant 0 : index
    %c0_52 = arith.constant 0 : index
    %126 = vector.load %arg8[%c0_51, %c0_52] : memref<64x32xf32, #tpu.memory_space<vmem>>, vector<64x32xf32>
    %cst_53 = arith.constant dense<0.000000e+00> : vector<16x32xf32>
    %127 = tpu.matmul %125, %126, %cst_53 {dimension_numbers = #tpu.dot_dimension_numbers<[1], [0], [0], [1], [0, 0, 1, 1], [], []>} : vector<16x64xf32>, vector<64x32xf32>, vector<16x32xf32> -> vector<16x32xf32>
    %c0_54 = arith.constant 0 : index
    %c0_55 = arith.constant 0 : index
    %128 = vector.load %arg9[%c0_54, %c0_55] : memref<1x32xf32, #tpu.memory_space<vmem>>, vector<1x32xf32>
    %129 = vector.broadcast %128 : vector<1x32xf32> to vector<16x32xf32>
    %130 = arith.addf %127, %129 : vector<16x32xf32>
    %131 = arith.addf %118, %130 : vector<16x32xf32>
    %c0_56 = arith.constant 0 : index
    %c0_57 = arith.constant 0 : index
    %132 = vector.load %arg12[%c0_56, %c0_57] : memref<1x32xf32, #tpu.memory_space<vmem>>, vector<1x32xf32>
    %c0_58 = arith.constant 0 : index
    %c0_59 = arith.constant 0 : index
    %133 = vector.load %arg13[%c0_58, %c0_59] : memref<1x32xf32, #tpu.memory_space<vmem>>, vector<1x32xf32>
    %cst_60 = arith.constant dense<0.000000e+00> : vector<16xf32>
    %134 = vector.multi_reduction <add>, %131, %cst_60 [1] : vector<16x32xf32> to vector<16xf32>
    %135 = vector.shape_cast %134 : vector<16xf32> to vector<16x1xf32>
    %cst_61 = arith.constant 3.200000e+01 : f32
    %136 = vector.broadcast %cst_61 : f32 to vector<16x1xf32>
    %137 = arith.divf %135, %136 : vector<16x1xf32>
    %138 = vector.broadcast %137 : vector<16x1xf32> to vector<16x32xf32>
    %139 = arith.subf %131, %138 : vector<16x32xf32>
    %140 = arith.mulf %139, %139 : vector<16x32xf32>
    %cst_62 = arith.constant dense<0.000000e+00> : vector<16xf32>
    %141 = vector.multi_reduction <add>, %140, %cst_62 [1] : vector<16x32xf32> to vector<16xf32>
    %142 = vector.shape_cast %141 : vector<16xf32> to vector<16x1xf32>
    %cst_63 = arith.constant 3.200000e+01 : f32
    %143 = vector.broadcast %cst_63 : f32 to vector<16x1xf32>
    %144 = arith.divf %142, %143 : vector<16x1xf32>
    %cst_64 = arith.constant 9.99999974E-6 : f32
    %145 = vector.broadcast %cst_64 : f32 to vector<16x1xf32>
    %146 = arith.addf %144, %145 : vector<16x1xf32>
    %147 = math.rsqrt %146 : vector<16x1xf32>
    %148 = vector.broadcast %147 : vector<16x1xf32> to vector<16x32xf32>
    %149 = arith.mulf %139, %148 : vector<16x32xf32>
    %150 = vector.broadcast %132 : vector<1x32xf32> to vector<16x32xf32>
    %151 = arith.mulf %149, %150 : vector<16x32xf32>
    %152 = vector.broadcast %133 : vector<1x32xf32> to vector<16x32xf32>
    %153 = arith.addf %151, %152 : vector<16x32xf32>
    %c0_65 = arith.constant 0 : index
    %c0_66 = arith.constant 0 : index
    %154 = vector.load %arg14[%c0_65, %c0_66] : memref<16x32xf32, #tpu.memory_space<vmem>>, vector<16x32xf32>
    tpu.vector_store %arg14[%c0_65, %c0_66], %153 {strides = array<i32>} : memref<16x32xf32, #tpu.memory_space<vmem>>, vector<16x32xf32>,
    return
  }
}

</mosaic_0001>

<llo_original>
// kernel: transformer_forward.1
$region0: #{transformer_forward.1}
  #allocation0 [shape = 'u32[]', space=smem, size = 0x4, offset = 0x4, fixed_abs, tag = 'smem constant byte address 0x4 - core index']
  #allocation1 [shape = 'u32[144,128]{1,0:T(1,128)}', space=vmem, size = 0x12000, scoped, tag = 'internal scratch']
  %s0 = inlined_call_operand.vmem [shape: f32[16,32], index: 0, kind: input, shape index: {}]
  %s1 = inlined_call_operand.vmem [shape: f32[16,16], index: 1, kind: input, shape index: {}]
  %s2 = inlined_call_operand.vmem [shape: f32[32,96], index: 2, kind: input, shape index: {}]
  %s3 = inlined_call_operand.vmem [shape: f32[1,96], index: 3, kind: input, shape index: {}]
  %s4 = inlined_call_operand.vmem [shape: f32[32,32], index: 4, kind: input, shape index: {}]
  %s5 = inlined_call_operand.vmem [shape: f32[1,32], index: 5, kind: input, shape index: {}]
  %s6 = inlined_call_operand.vmem [shape: f32[32,64], index: 6, kind: input, shape index: {}]
  %s7 = inlined_call_operand.vmem [shape: f32[1,64], index: 7, kind: input, shape index: {}]
  %s8 = inlined_call_operand.vmem [shape: f32[64,32], index: 8, kind: input, shape index: {}]
  %s9 = inlined_call_operand.vmem [shape: f32[1,32], index: 9, kind: input, shape index: {}]
  %s10 = inlined_call_operand.vmem [shape: f32[1,32], index: 10, kind: input, shape index: {}]
  %s11 = inlined_call_operand.vmem [shape: f32[1,32], index: 11, kind: input, shape index: {}]
  %s12 = inlined_call_operand.vmem [shape: f32[1,32], index: 12, kind: input, shape index: {}]
  %s13 = inlined_call_operand.vmem [shape: f32[1,32], index: 13, kind: input, shape index: {}]
  %s14 = inlined_call_operand.hbm [shape: f32[16,32], index: 14, kind: output, shape index: {}]
  %s15 = sld [smem:[#allocation0]]
  $region66: #{transformer_forward.1} parent=0
    _
  %s17 = ssub.s32 1, %s15
  %s18 = scalar_select 0, %s17, %s15
  $region1: #{transformer_forward.1} parent=0
    #allocation2 [shape = 'u8[8192]{0}', space=vmem, size = 0x2000, scoped, tag = 'output window, operand 0, single buffered']
    #allocation3 [shape = 's32[1]{0}', space=sflag, size = 0x4, scoped, tag = 'scoped memory for transformer_forward.1']
    %19 = vsyncpa [#allocation3], 0
    // Predicated region
    $region2: #{transformer_forward.1} parent=1 // pred_check
      _
    $region3: #{transformer_forward.1} parent=1 // pred_check_branch
      %21 = sbr.rel (0) target = $region5
    $region4: #{transformer_forward.1} parent=1 // pred_region
      _
    $region5: #{transformer_forward.1} parent=1 // pred_fallthru
      _
    // Predicated region
    $region6: #{transformer_forward.1} parent=1 // pred_check
      _
    $region7: #{transformer_forward.1} parent=1 // pred_check_branch
      %23 = sbr.rel (0) target = $region9
    $region8: #{transformer_forward.1} parent=1 // pred_region
      _
    $region9: #{transformer_forward.1} parent=1 // pred_fallthru
      _
    // Predicated region
    $region10: #{transformer_forward.1} parent=1 // pred_check
      _
    $region11: #{transformer_forward.1} parent=1 // pred_check_branch
      %25 = sbr.rel (0) target = $region13
    $region12: #{transformer_forward.1} parent=1 // pred_region
      _
    $region13: #{transformer_forward.1} parent=1 // pred_fallthru
      _
    // Predicated region
    $region14: #{transformer_forward.1} parent=1 // pred_check
      _
    $region15: #{transformer_forward.1} parent=1 // pred_check_branch
      %27 = sbr.rel (0) target = $region17
    $region16: #{transformer_forward.1} parent=1 // pred_region
      _
    $region17: #{transformer_forward.1} parent=1 // pred_fallthru
      _
    // Predicated region
    $region18: #{transformer_forward.1} parent=1 // pred_check
      _
    $region19: #{transformer_forward.1} parent=1 // pred_check_branch
      %29 = sbr.rel (0) target = $region21
    $region20: #{transformer_forward.1} parent=1 // pred_region
      _
    $region21: #{transformer_forward.1} parent=1 // pred_fallthru
      _
    // Predicated region
    $region22: #{transformer_forward.1} parent=1 // pred_check
      _
    $region23: #{transformer_forward.1} parent=1 // pred_check_branch
      %31 = sbr.rel (0) target = $region25
    $region24: #{transformer_forward.1} parent=1 // pred_region
      _
    $region25: #{transformer_forward.1} parent=1 // pred_fallthru
      _
    // Predicated region
    $region26: #{transformer_forward.1} parent=1 // pred_check
      _
    $region27: #{transformer_forward.1} parent=1 // pred_check_branch
      %33 = sbr.rel (0) target = $region29
    $region28: #{transformer_forward.1} parent=1 // pred_region
      _
    $region29: #{transformer_forward.1} parent=1 // pred_fallthru
      _
    // Predicated region
    $region30: #{transformer_forward.1} parent=1 // pred_check
      _
    $region31: #{transformer_forward.1} parent=1 // pred_check_branch
      %35 = sbr.rel (0) target = $region33
    $region32: #{transformer_forward.1} parent=1 // pred_region
      _
    $region33: #{transformer_forward.1} parent=1 // pred_fallthru
      _
    // Predicated region
    $region34: #{transformer_forward.1} parent=1 // pred_check
      _
    $region35: #{transformer_forward.1} parent=1 // pred_check_branch
      %37 = sbr.rel (0) target = $region37
    $region36: #{transformer_forward.1} parent=1 // pred_region
      _
    $region37: #{transformer_forward.1} parent=1 // pred_fallthru
      _
    // Predicated region
    $region38: #{transformer_forward.1} parent=1 // pred_check
      _
    $region39: #{transformer_forward.1} parent=1 // pred_check_branch
      %39 = sbr.rel (0) target = $region41
    $region40: #{transformer_forward.1} parent=1 // pred_region
      _
    $region41: #{transformer_forward.1} parent=1 // pred_fallthru
      _
    // Predicated region
    $region42: #{transformer_forward.1} parent=1 // pred_check
      _
    $region43: #{transformer_forward.1} parent=1 // pred_check_branch
      %41 = sbr.rel (0) target = $region45
    $region44: #{transformer_forward.1} parent=1 // pred_region
      _
    $region45: #{transformer_forward.1} parent=1 // pred_fallthru
      _
    // Predicated region
    $region46: #{transformer_forward.1} parent=1 // pred_check
      _
    $region47: #{transformer_forward.1} parent=1 // pred_check_branch
      %43 = sbr.rel (0) target = $region49
    $region48: #{transformer_forward.1} parent=1 // pred_region
      _
    $region49: #{transformer_forward.1} parent=1 // pred_fallthru
      _
    // Predicated region
    $region50: #{transformer_forward.1} parent=1 // pred_check
      _
    $region51: #{transformer_forward.1} parent=1 // pred_check_branch
      %45 = sbr.rel (0) target = $region53
    $region52: #{transformer_forward.1} parent=1 // pred_region
      _
    $region53: #{transformer_forward.1} parent=1 // pred_fallthru
      _
    // Predicated region
    $region54: #{transformer_forward.1} parent=1 // pred_check
      _
    $region55: #{transformer_forward.1} parent=1 // pred_check_branch
      %47 = sbr.rel (0) target = $region57
    $region56: #{transformer_forward.1} parent=1 // pred_region
      _
    $region57: #{transformer_forward.1} parent=1 // pred_fallthru
      _
    %v48 = vld [vmem:[%s0] sm:$0xff]
    %v49 = vld [vmem:[%s0 + $0x8] sm:$0xff]
    %v50 = vld [vmem:[%s1] sm:$0xff]
    %v51 = vld [vmem:[%s1 + $0x8] sm:$0xff]
    %v52 = vld [vmem:[%s2] sm:$0xff]
    %v53 = vld [vmem:[%s2 + $0x8] sm:$0xff]
    %v54 = vld [vmem:[%s2 + $0x10] sm:$0xff]
    %v55 = vld [vmem:[%s2 + $0x18] sm:$0xff]
    %v56 = vld [vmem:[%s3] sm:$0x1]
    %v58 = vlaneseq
    %v59 = vshrl.u32 %v58, 7
    %v60 = vsub.s32 0, %v59
    %v61 = vrot.slane %v56, %v60
    %vm63 = vcmask 261120
    %v65 = vsel %vm63, %v48, 0
    %v68 = vsel %vm63, %v49, 0
    %70 = vmatprep.subr.mxu0 0.0
    %71 = vmatpush1.msra.mxu0 %v52
    %72 = vmatprep.subr.mxu0 0.0
    %73 = vmatpush1.msra.mxu0 %v53
    %74 = vmatprep.subr.mxu0 0.0
    %75 = vmatpush1.msra.mxu0 %v54
    %76 = vmatprep.subr.mxu0 0.0
    %77 = vmatpush1.msra.mxu0 %v55
    %78 = vmatprep.subr.mxu0 0.0
    %79 = vmatpush1.msra.mxu0 0.0
    %80 = vmatprep.subr.mxu0 0.0
    %81 = vmatpush1.msra.mxu0 0.0
    %82 = vmatprep.subr.mxu0 0.0
    %83 = vmatpush1.msra.mxu0 0.0
    %84 = vmatprep.subr.mxu0 0.0
    %85 = vmatpush1.msra.mxu0 0.0
    %86 = vmatprep.subr.mxu0 0.0
    %87 = vmatpush1.msra.mxu0 0.0
    %88 = vmatprep.subr.mxu0 0.0
    %89 = vmatpush1.msra.mxu0 0.0
    %90 = vmatprep.subr.mxu0 0.0
    %91 = vmatpush1.msra.mxu0 0.0
    %92 = vmatprep.subr.mxu0 0.0
    %93 = vmatpush1.msra.mxu0 0.0
    %94 = vmatprep.subr.mxu0 0.0
    %95 = vmatpush1.msra.mxu0 0.0
    %96 = vmatprep.subr.mxu0 0.0
    %97 = vmatpush1.msra.mxu0 0.0
    %98 = vmatprep.subr.mxu0 0.0
    %99 = vmatpush1.msra.mxu0 0.0
    %100 = vmatprep.subr.mxu0 0.0
    %101 = vmatpush1.msra.mxu0 0.0
    %102 = vmatprep.subr.mxu0 0.0
    %103 = vmatpush1.msra.mxu0 0.0
    %104 = vmatprep.subr.mxu0 0.0
    %105 = vmatpush1.msra.mxu0 0.0
    %106 = vmatprep.subr.mxu0 0.0
    %107 = vmatpush1.msra.mxu0 0.0
    %108 = vmatprep.subr.mxu0 0.0
    %109 = vmatpush1.msra.mxu0 0.0
    %110 = vmatprep.subr.mxu0 0.0
    %111 = vmatpush1.msra.mxu0 0.0
    %112 = vmatprep.subr.mxu0 0.0
    %113 = vmatpush1.msra.mxu0 0.0
    %114 = vmatprep.subr.mxu0 0.0
    %115 = vmatpush1.msra.mxu0 0.0
    %116 = vmatprep.subr.mxu0 0.0
    %117 = vmatpush1.msra.mxu0 0.0
    %118 = vmatprep.subr.mxu0 0.0
    %119 = vmatpush1.msra.mxu0 0.0
    %120 = vmatprep.subr.mxu0 0.0
    %121 = vmatpush1.msra.mxu0 0.0
    %122 = vmatprep.subr.mxu0 0.0
    %123 = vmatpush1.msra.mxu0 0.0
    %124 = vmatprep.subr.mxu0 0.0
    %125 = vmatpush1.msra.mxu0 0.0
    %126 = vmatprep.subr.mxu0 0.0
    %127 = vmatpush1.msra.mxu0 0.0
    %128 = vmatprep.subr.mxu0 0.0
    %129 = vmatpush1.msra.mxu0 0.0
    %130 = vmatprep.subr.mxu0 0.0
    %131 = vmatpush1.msra.mxu0 0.0
    %132 = vmatprep.subr.mxu0 0.0
    %133 = vmatpush1.msra.mxu0 0.0
    %134 = vmatprep.mubr.f32.mxu0 0.0
    %135 = vmatmul.mubr.f32.gmra.mrb[0].mxu0 %v65
    %v136 = vpop.f32.mrb[0].mxu0
    %v137 = vadd.f32 %v61, %v136
    %v138 = vpop.f32.mrb[0].mxu0
    %139 = vmatprep.mubr.f32.mxu0 0.0
    %140 = vmatmul.mubr.f32.gmra.mrb[0].mxu0 %v68
    %v141 = vpop.f32.mrb[0].mxu0
    %v142 = vadd.f32 %v61, %v141
    %v143 = vpop.f32.mrb[0].mxu0
    %144 = vdwg.mxu0
    %v145 = vld [vmem:[%s4] sm:$0xff]
    %v146 = vld [vmem:[%s4 + $0x8] sm:$0xff]
    %v147 = vld [vmem:[%s4 + $0x10] sm:$0xff]
    %v148 = vld [vmem:[%s4 + $0x18] sm:$0xff]
    %v149 = vld [vmem:[%s5] sm:$0x1]
    %v151 = vlaneseq
    %v152 = vshrl.u32 %v151, 7
    %v153 = vsub.s32 0, %v152
    %v154 = vrot.slane %v149, %v153
    %v156 = vadd.f32 %v154, 0.0
    %159 = vrot.lane.b32.xlu0 %v137, 96
    %v160 = vpop.permute.xlu0 %159
    %161 = vrot.lane.b32.xlu0 %v142, 96
    %v162 = vpop.permute.xlu0 %161
    %vm163 = vcmask 64512
    %v164 = vsel %vm163, %v137, 0
    %v166 = vsel %vm163, %v142, 0
    %v168 = vsel %vm163, %v160, 0
    %v170 = vsel %vm163, %v162, 0
    %172 = vmatprep.subr.mxu0 0.0
    %173 = vmatpush1.xpose.msra.mxu0 %v168
    %174 = vmatprep.subr.mxu0 0.0
    %175 = vmatpush1.xpose.msra.mxu0 %v170
    %176 = vmatprep.subr.mxu0 0.0
    %177 = vmatpush1.xpose.msra.mxu0 0.0
    %178 = vmatprep.subr.mxu0 0.0
    %179 = vmatpush1.xpose.msra.mxu0 0.0
    %180 = vmatprep.subr.mxu0 0.0
    %181 = vmatpush1.xpose.msra.mxu0 0.0
    %182 = vmatprep.subr.mxu0 0.0
    %183 = vmatpush1.xpose.msra.mxu0 0.0
    %184 = vmatprep.subr.mxu0 0.0
    %185 = vmatpush1.xpose.msra.mxu0 0.0
    %186 = vmatprep.subr.mxu0 0.0
    %187 = vmatpush1.xpose.msra.mxu0 0.0
    %188 = vmatprep.subr.mxu0 0.0
    %189 = vmatpush1.xpose.msra.mxu0 0.0
    %190 = vmatprep.subr.mxu0 0.0
    %191 = vmatpush1.xpose.msra.mxu0 0.0
    %192 = vmatprep.subr.mxu0 0.0
    %193 = vmatpush1.xpose.msra.mxu0 0.0
    %194 = vmatprep.subr.mxu0 0.0
    %195 = vmatpush1.xpose.msra.mxu0 0.0
    %196 = vmatprep.subr.mxu0 0.0
    %197 = vmatpush1.xpose.msra.mxu0 0.0
    %198 = vmatprep.subr.mxu0 0.0
    %199 = vmatpush1.xpose.msra.mxu0 0.0
    %200 = vmatprep.subr.mxu0 0.0
    %201 = vmatpush1.xpose.msra.mxu0 0.0
    %202 = vmatprep.subr.mxu0 0.0
    %203 = vmatpush1.xpose.msra.mxu0 0.0
    %204 = vmatprep.subr.mxu0 0.0
    %205 = vmatpush1.xpose.msra.mxu0 0.0
    %206 = vmatprep.subr.mxu0 0.0
    %207 = vmatpush1.xpose.msra.mxu0 0.0
    %208 = vmatprep.subr.mxu0 0.0
    %209 = vmatpush1.xpose.msra.mxu0 0.0
    %210 = vmatprep.subr.mxu0 0.0
    %211 = vmatpush1.xpose.msra.mxu0 0.0
    %212 = vmatprep.subr.mxu0 0.0
    %213 = vmatpush1.xpose.msra.mxu0 0.0
    %214 = vmatprep.subr.mxu0 0.0
    %215 = vmatpush1.xpose.msra.mxu0 0.0
    %216 = vmatprep.subr.mxu0 0.0
    %217 = vmatpush1.xpose.msra.mxu0 0.0
    %218 = vmatprep.subr.mxu0 0.0
    %219 = vmatpush1.xpose.msra.mxu0 0.0
    %220 = vmatprep.subr.mxu0 0.0
    %221 = vmatpush1.xpose.msra.mxu0 0.0
    %222 = vmatprep.subr.mxu0 0.0
    %223 = vmatpush1.xpose.msra.mxu0 0.0
    %224 = vmatprep.subr.mxu0 0.0
    %225 = vmatpush1.xpose.msra.mxu0 0.0
    %226 = vmatprep.subr.mxu0 0.0
    %227 = vmatpush1.xpose.msra.mxu0 0.0
    %228 = vmatprep.subr.mxu0 0.0
    %229 = vmatpush1.xpose.msra.mxu0 0.0
    %230 = vmatprep.subr.mxu0 0.0
    %231 = vmatpush1.xpose.msra.mxu0 0.0
    %232 = vmatprep.subr.mxu0 0.0
    %233 = vmatpush1.xpose.msra.mxu0 0.0
    %234 = vmatprep.subr.mxu0 0.0
    %235 = vmatpush1.xpose.msra.mxu0 0.0
    %236 = vmatprep.mubr.f32.mxu0 0.0
    %237 = vmatmul.mubr.f32.gmra.mrb[0].mxu0 %v164
    %v238 = vpop.f32.mrb[0].mxu0
    %v239 = vadd.f32 0.0, %v238
    %v240 = vpop.f32.mrb[0].mxu0
    %241 = vmatprep.mubr.f32.mxu0 0.0
    %242 = vmatmul.mubr.f32.gmra.mrb[0].mxu0 %v166
    %v243 = vpop.f32.mrb[0].mxu0
    %v244 = vadd.f32 0.0, %v243
    %v245 = vpop.f32.mrb[0].mxu0
    %246 = vdwg.mxu0
    %v247 = vmul.f32 %v239, 0.35355338
    %v248 = vmul.f32 %v244, 0.35355338
    %v249 = vadd.f32 %v247, %v50
    %v250 = vadd.f32 %v248, %v51
    %vm251 = vcmask 130048
    %v252 = vsel %vm251, %v249, -inf
    %253 = vmax.xlane.f32.xlu0 %v252
    %v254 = vpop.xlane.xlu0 %253
    %v255 = vsel %vm251, %v250, -inf
    %256 = vmax.xlane.f32.xlu0 %v255
    %v257 = vpop.xlane.xlu0 %256
    %v258 = vsub.f32 %v249, %v254
    %v259 = vsub.f32 %v250, %v257
    %v260 = vmul.f32 %v258, 1.442695
    %v261 = vpow.pop %v260
    %v262 = vmul.f32 %v259, 1.442695
    %v263 = vpow.pop %v262
    %v264 = vsel %vm251, %v261, 0.0
    %265 = vadd.xlane.f32.xlu0 %v264
    %v266 = vpop.xlane.xlu0 %265
    %v267 = vsel %vm251, %v263, 0.0
    %268 = vadd.xlane.f32.xlu0 %v267
    %v269 = vpop.xlane.xlu0 %268
    %v270 = vrcp.pop %v266
    %v271 = vrcp.pop %v269
    %v272 = vmul.f32 %v261, %v270
    %v273 = vmul.f32 %v263, %v271
    %274 = vrot.lane.b32.xlu0 %v137, 64
    %v275 = vpop.permute.xlu0 %274
    %276 = vrot.lane.b32.xlu0 %v142, 64
    %v277 = vpop.permute.xlu0 %276
    %v281 = vsel %vm251, %v272, 0
    %v284 = vsel %vm251, %v273, 0
    %286 = vmatprep.subr.mxu0 0.0
    %287 = vmatpush1.msra.mxu0 %v275
    %288 = vmatprep.subr.mxu0 0.0
    %289 = vmatpush1.msra.mxu0 %v277
    %290 = vmatprep.subr.mxu0 0.0
    %291 = vmatpush1.msra.mxu0 0.0
    %292 = vmatprep.subr.mxu0 0.0
    %293 = vmatpush1.msra.mxu0 0.0
    %294 = vmatprep.subr.mxu0 0.0
    %295 = vmatpush1.msra.mxu0 0.0
    %296 = vmatprep.subr.mxu0 0.0
    %297 = vmatpush1.msra.mxu0 0.0
    %298 = vmatprep.subr.mxu0 0.0
    %299 = vmatpush1.msra.mxu0 0.0
    %300 = vmatprep.subr.mxu0 0.0
    %301 = vmatpush1.msra.mxu0 0.0
    %302 = vmatprep.subr.mxu0 0.0
    %303 = vmatpush1.msra.mxu0 0.0
    %304 = vmatprep.subr.mxu0 0.0
    %305 = vmatpush1.msra.mxu0 0.0
    %306 = vmatprep.subr.mxu0 0.0
    %307 = vmatpush1.msra.mxu0 0.0
    %308 = vmatprep.subr.mxu0 0.0
    %309 = vmatpush1.msra.mxu0 0.0
    %310 = vmatprep.subr.mxu0 0.0
    %311 = vmatpush1.msra.mxu0 0.0
    %312 = vmatprep.subr.mxu0 0.0
    %313 = vmatpush1.msra.mxu0 0.0
    %314 = vmatprep.subr.mxu0 0.0
    %315 = vmatpush1.msra.mxu0 0.0
    %316 = vmatprep.subr.mxu0 0.0
    %317 = vmatpush1.msra.mxu0 0.0
    %318 = vmatprep.subr.mxu0 0.0
    %319 = vmatpush1.msra.mxu0 0.0
    %320 = vmatprep.subr.mxu0 0.0
    %321 = vmatpush1.msra.mxu0 0.0
    %322 = vmatprep.subr.mxu0 0.0
    %323 = vmatpush1.msra.mxu0 0.0
    %324 = vmatprep.subr.mxu0 0.0
    %325 = vmatpush1.msra.mxu0 0.0
    %326 = vmatprep.subr.mxu0 0.0
    %327 = vmatpush1.msra.mxu0 0.0
    %328 = vmatprep.subr.mxu0 0.0
    %329 = vmatpush1.msra.mxu0 0.0
    %330 = vmatprep.subr.mxu0 0.0
    %331 = vmatpush1.msra.mxu0 0.0
    %332 = vmatprep.subr.mxu0 0.0
    %333 = vmatpush1.msra.mxu0 0.0
    %334 = vmatprep.subr.mxu0 0.0
    %335 = vmatpush1.msra.mxu0 0.0
    %336 = vmatprep.subr.mxu0 0.0
    %337 = vmatpush1.msra.mxu0 0.0
    %338 = vmatprep.subr.mxu0 0.0
    %339 = vmatpush1.msra.mxu0 0.0
    %340 = vmatprep.subr.mxu0 0.0
    %341 = vmatpush1.msra.mxu0 0.0
    %342 = vmatprep.subr.mxu0 0.0
    %343 = vmatpush1.msra.mxu0 0.0
    %344 = vmatprep.subr.mxu0 0.0
    %345 = vmatpush1.msra.mxu0 0.0
    %346 = vmatprep.subr.mxu0 0.0
    %347 = vmatpush1.msra.mxu0 0.0
    %348 = vmatprep.subr.mxu0 0.0
    %349 = vmatpush1.msra.mxu0 0.0
    %350 = vmatprep.mubr.f32.mxu0 0.0
    %351 = vmatmul.mubr.f32.gmra.mrb[0].mxu0 %v281
    %v352 = vpop.f32.mrb[0].mxu0
    %v353 = vadd.f32 0.0, %v352
    %v354 = vpop.f32.mrb[0].mxu0
    %355 = vmatprep.mubr.f32.mxu0 0.0
    %356 = vmatmul.mubr.f32.gmra.mrb[0].mxu0 %v284
    %v357 = vpop.f32.mrb[0].mxu0
    %v358 = vadd.f32 0.0, %v357
    %v359 = vpop.f32.mrb[0].mxu0
    %360 = vdwg.mxu0
    %v362 = vsel %vm163, %v353, 0
    %v365 = vsel %vm163, %v358, 0
    %367 = vmatprep.subr.mxu0 0.0
    %368 = vmatpush1.msra.mxu0 %v145
    %369 = vmatprep.subr.mxu0 0.0
    %370 = vmatpush1.msra.mxu0 0.0
    %371 = vmatprep.subr.mxu0 0.0
    %372 = vmatpush1.msra.mxu0 0.0
    %373 = vmatprep.subr.mxu0 0.0
    %374 = vmatpush1.msra.mxu0 0.0
    %375 = vmatprep.subr.mxu0 0.0
    %376 = vmatpush1.msra.mxu0 0.0
    %377 = vmatprep.subr.mxu0 0.0
    %378 = vmatpush1.msra.mxu0 0.0
    %379 = vmatprep.subr.mxu0 0.0
    %380 = vmatpush1.msra.mxu0 0.0
    %381 = vmatprep.subr.mxu0 0.0
    %382 = vmatpush1.msra.mxu0 0.0
    %383 = vmatprep.subr.mxu0 0.0
    %384 = vmatpush1.msra.mxu0 0.0
    %385 = vmatprep.subr.mxu0 0.0
    %386 = vmatpush1.msra.mxu0 0.0
    %387 = vmatprep.subr.mxu0 0.0
    %388 = vmatpush1.msra.mxu0 0.0
    %389 = vmatprep.subr.mxu0 0.0
    %390 = vmatpush1.msra.mxu0 0.0
    %391 = vmatprep.subr.mxu0 0.0
    %392 = vmatpush1.msra.mxu0 0.0
    %393 = vmatprep.subr.mxu0 0.0
    %394 = vmatpush1.msra.mxu0 0.0
    %395 = vmatprep.subr.mxu0 0.0
    %396 = vmatpush1.msra.mxu0 0.0
    %397 = vmatprep.subr.mxu0 0.0
    %398 = vmatpush1.msra.mxu0 0.0
    %399 = vmatprep.subr.mxu0 0.0
    %400 = vmatpush1.msra.mxu0 0.0
    %401 = vmatprep.subr.mxu0 0.0
    %402 = vmatpush1.msra.mxu0 0.0
    %403 = vmatprep.subr.mxu0 0.0
    %404 = vmatpush1.msra.mxu0 0.0
    %405 = vmatprep.subr.mxu0 0.0
    %406 = vmatpush1.msra.mxu0 0.0
    %407 = vmatprep.subr.mxu0 0.0
    %408 = vmatpush1.msra.mxu0 0.0
    %409 = vmatprep.subr.mxu0 0.0
    %410 = vmatpush1.msra.mxu0 0.0
    %411 = vmatprep.subr.mxu0 0.0
    %412 = vmatpush1.msra.mxu0 0.0
    %413 = vmatprep.subr.mxu0 0.0
    %414 = vmatpush1.msra.mxu0 0.0
    %415 = vmatprep.subr.mxu0 0.0
    %416 = vmatpush1.msra.mxu0 0.0
    %417 = vmatprep.subr.mxu0 0.0
    %418 = vmatpush1.msra.mxu0 0.0
    %419 = vmatprep.subr.mxu0 0.0
    %420 = vmatpush1.msra.mxu0 0.0
    %421 = vmatprep.subr.mxu0 0.0
    %422 = vmatpush1.msra.mxu0 0.0
    %423 = vmatprep.subr.mxu0 0.0
    %424 = vmatpush1.msra.mxu0 0.0
    %425 = vmatprep.subr.mxu0 0.0
    %426 = vmatpush1.msra.mxu0 0.0
    %427 = vmatprep.subr.mxu0 0.0
    %428 = vmatpush1.msra.mxu0 0.0
    %429 = vmatprep.subr.mxu0 0.0
    %430 = vmatpush1.msra.mxu0 0.0
    %431 = vmatprep.mubr.f32.mxu0 0.0
    %432 = vmatmul.mubr.f32.gmra.mrb[0].mxu0 %v362
    %v433 = vpop.f32.mrb[0].mxu0
    %v434 = vadd.f32 0.0, %v433
    %v435 = vpop.f32.mrb[0].mxu0
    %436 = vmatprep.mubr.f32.mxu0 0.0
    %437 = vmatmul.mubr.f32.gmra.mrb[0].mxu0 %v365
    %v438 = vpop.f32.mrb[0].mxu0
    %v439 = vadd.f32 0.0, %v438
    %v440 = vpop.f32.mrb[0].mxu0
    %441 = vdwg.mxu0
    %v442 = vadd.f32 %v156, %v434
    %v443 = vadd.f32 %v156, %v439
    %444 = vrot.lane.b32.xlu0 %v137, 120
    %v445 = vpop.permute.xlu0 %444
    %446 = vrot.lane.b32.xlu0 %v142, 120
    %v447 = vpop.permute.xlu0 %446
    %448 = vrot.lane.b32.xlu0 %v137, 88
    %v449 = vpop.permute.xlu0 %448
    %450 = vrot.lane.b32.xlu0 %v142, 88
    %v451 = vpop.permute.xlu0 %450
    %v452 = vsel %vm163, %v445, 0
    %v454 = vsel %vm163, %v447, 0
    %v456 = vsel %vm163, %v449, 0
    %v458 = vsel %vm163, %v451, 0
    %460 = vmatprep.subr.mxu0 0.0
    %461 = vmatpush1.xpose.msra.mxu0 %v456
    %462 = vmatprep.subr.mxu0 0.0
    %463 = vmatpush1.xpose.msra.mxu0 %v458
    %464 = vmatprep.subr.mxu0 0.0
    %465 = vmatpush1.xpose.msra.mxu0 0.0
    %466 = vmatprep.subr.mxu0 0.0
    %467 = vmatpush1.xpose.msra.mxu0 0.0
    %468 = vmatprep.subr.mxu0 0.0
    %469 = vmatpush1.xpose.msra.mxu0 0.0
    %470 = vmatprep.subr.mxu0 0.0
    %471 = vmatpush1.xpose.msra.mxu0 0.0
    %472 = vmatprep.subr.mxu0 0.0
    %473 = vmatpush1.xpose.msra.mxu0 0.0
    %474 = vmatprep.subr.mxu0 0.0
    %475 = vmatpush1.xpose.msra.mxu0 0.0
    %476 = vmatprep.subr.mxu0 0.0
    %477 = vmatpush1.xpose.msra.mxu0 0.0
    %478 = vmatprep.subr.mxu0 0.0
    %479 = vmatpush1.xpose.msra.mxu0 0.0
    %480 = vmatprep.subr.mxu0 0.0
    %481 = vmatpush1.xpose.msra.mxu0 0.0
    %482 = vmatprep.subr.mxu0 0.0
    %483 = vmatpush1.xpose.msra.mxu0 0.0
    %484 = vmatprep.subr.mxu0 0.0
    %485 = vmatpush1.xpose.msra.mxu0 0.0
    %486 = vmatprep.subr.mxu0 0.0
    %487 = vmatpush1.xpose.msra.mxu0 0.0
    %488 = vmatprep.subr.mxu0 0.0
    %489 = vmatpush1.xpose.msra.mxu0 0.0
    %490 = vmatprep.subr.mxu0 0.0
    %491 = vmatpush1.xpose.msra.mxu0 0.0
    %492 = vmatprep.subr.mxu0 0.0
    %493 = vmatpush1.xpose.msra.mxu0 0.0
    %494 = vmatprep.subr.mxu0 0.0
    %495 = vmatpush1.xpose.msra.mxu0 0.0
    %496 = vmatprep.subr.mxu0 0.0
    %497 = vmatpush1.xpose.msra.mxu0 0.0
    %498 = vmatprep.subr.mxu0 0.0
    %499 = vmatpush1.xpose.msra.mxu0 0.0
    %500 = vmatprep.subr.mxu0 0.0
    %501 = vmatpush1.xpose.msra.mxu0 0.0
    %502 = vmatprep.subr.mxu0 0.0
    %503 = vmatpush1.xpose.msra.mxu0 0.0
    %504 = vmatprep.subr.mxu0 0.0
    %505 = vmatpush1.xpose.msra.mxu0 0.0
    %506 = vmatprep.subr.mxu0 0.0
    %507 = vmatpush1.xpose.msra.mxu0 0.0
    %508 = vmatprep.subr.mxu0 0.0
    %509 = vmatpush1.xpose.msra.mxu0 0.0
    %510 = vmatprep.subr.mxu0 0.0
    %511 = vmatpush1.xpose.msra.mxu0 0.0
    %512 = vmatprep.subr.mxu0 0.0
    %513 = vmatpush1.xpose.msra.mxu0 0.0
    %514 = vmatprep.subr.mxu0 0.0
    %515 = vmatpush1.xpose.msra.mxu0 0.0
    %516 = vmatprep.subr.mxu0 0.0
    %517 = vmatpush1.xpose.msra.mxu0 0.0
    %518 = vmatprep.subr.mxu0 0.0
    %519 = vmatpush1.xpose.msra.mxu0 0.0
    %520 = vmatprep.subr.mxu0 0.0
    %521 = vmatpush1.xpose.msra.mxu0 0.0
    %522 = vmatprep.subr.mxu0 0.0
    %523 = vmatpush1.xpose.msra.mxu0 0.0
    %524 = vmatprep.mubr.f32.mxu0 0.0
    %525 = vmatmul.mubr.f32.gmra.mrb[0].mxu0 %v452
    %v526 = vpop.f32.mrb[0].mxu0
    %v527 = vadd.f32 0.0, %v526
    %v528 = vpop.f32.mrb[0].mxu0
    %529 = vmatprep.mubr.f32.mxu0 0.0
    %530 = vmatmul.mubr.f32.gmra.mrb[0].mxu0 %v454
    %v531 = vpop.f32.mrb[0].mxu0
    %v532 = vadd.f32 0.0, %v531
    %v533 = vpop.f32.mrb[0].mxu0
    %534 = vdwg.mxu0
    %v535 = vmul.f32 %v527, 0.35355338
    %v536 = vmul.f32 %v532, 0.35355338
    %v537 = vadd.f32 %v535, %v50
    %v538 = vadd.f32 %v536, %v51
    %v539 = vsel %vm251, %v537, -inf
    %540 = vmax.xlane.f32.xlu0 %v539
    %v541 = vpop.xlane.xlu0 %540
    %v542 = vsel %vm251, %v538, -inf
    %543 = vmax.xlane.f32.xlu0 %v542
    %v544 = vpop.xlane.xlu0 %543
    %v545 = vsub.f32 %v537, %v541
    %v546 = vsub.f32 %v538, %v544
    %v547 = vmul.f32 %v545, 1.442695
    %v548 = vpow.pop %v547
    %v549 = vmul.f32 %v546, 1.442695
    %v550 = vpow.pop %v549
    %v551 = vsel %vm251, %v548, 0.0
    %552 = vadd.xlane.f32.xlu0 %v551
    %v553 = vpop.xlane.xlu0 %552
    %v554 = vsel %vm251, %v550, 0.0
    %555 = vadd.xlane.f32.xlu0 %v554
    %v556 = vpop.xlane.xlu0 %555
    %v557 = vrcp.pop %v553
    %v558 = vrcp.pop %v556
    %v559 = vmul.f32 %v548, %v557
    %v560 = vmul.f32 %v550, %v558
    %561 = vrot.lane.b32.xlu0 %v137, 56
    %v562 = vpop.permute.xlu0 %561
    %563 = vrot.lane.b32.xlu0 %v142, 56
    %v564 = vpop.permute.xlu0 %563
    %v568 = vsel %vm251, %v559, 0
    %v571 = vsel %vm251, %v560, 0
    %573 = vmatprep.subr.mxu0 0.0
    %574 = vmatpush1.msra.mxu0 %v562
    %575 = vmatprep.subr.mxu0 0.0
    %576 = vmatpush1.msra.mxu0 %v564
    %577 = vmatprep.subr.mxu0 0.0
    %578 = vmatpush1.msra.mxu0 0.0
    %579 = vmatprep.subr.mxu0 0.0
    %580 = vmatpush1.msra.mxu0 0.0
    %581 = vmatprep.subr.mxu0 0.0
    %582 = vmatpush1.msra.mxu0 0.0
    %583 = vmatprep.subr.mxu0 0.0
    %584 = vmatpush1.msra.mxu0 0.0
    %585 = vmatprep.subr.mxu0 0.0
    %586 = vmatpush1.msra.mxu0 0.0
    %587 = vmatprep.subr.mxu0 0.0
    %588 = vmatpush1.msra.mxu0 0.0
    %589 = vmatprep.subr.mxu0 0.0
    %590 = vmatpush1.msra.mxu0 0.0
    %591 = vmatprep.subr.mxu0 0.0
    %592 = vmatpush1.msra.mxu0 0.0
    %593 = vmatprep.subr.mxu0 0.0
    %594 = vmatpush1.msra.mxu0 0.0
    %595 = vmatprep.subr.mxu0 0.0
    %596 = vmatpush1.msra.mxu0 0.0
    %597 = vmatprep.subr.mxu0 0.0
    %598 = vmatpush1.msra.mxu0 0.0
    %599 = vmatprep.subr.mxu0 0.0
    %600 = vmatpush1.msra.mxu0 0.0
    %601 = vmatprep.subr.mxu0 0.0
    %602 = vmatpush1.msra.mxu0 0.0
    %603 = vmatprep.subr.mxu0 0.0
    %604 = vmatpush1.msra.mxu0 0.0
    %605 = vmatprep.subr.mxu0 0.0
    %606 = vmatpush1.msra.mxu0 0.0
    %607 = vmatprep.subr.mxu0 0.0
    %608 = vmatpush1.msra.mxu0 0.0
    %609 = vmatprep.subr.mxu0 0.0
    %610 = vmatpush1.msra.mxu0 0.0
    %611 = vmatprep.subr.mxu0 0.0
    %612 = vmatpush1.msra.mxu0 0.0
    %613 = vmatprep.subr.mxu0 0.0
    %614 = vmatpush1.msra.mxu0 0.0
    %615 = vmatprep.subr.mxu0 0.0
    %616 = vmatpush1.msra.mxu0 0.0
    %617 = vmatprep.subr.mxu0 0.0
    %618 = vmatpush1.msra.mxu0 0.0
    %619 = vmatprep.subr.mxu0 0.0
    %620 = vmatpush1.msra.mxu0 0.0
    %621 = vmatprep.subr.mxu0 0.0
    %622 = vmatpush1.msra.mxu0 0.0
    %623 = vmatprep.subr.mxu0 0.0
    %624 = vmatpush1.msra.mxu0 0.0
    %625 = vmatprep.subr.mxu0 0.0
    %626 = vmatpush1.msra.mxu0 0.0
    %627 = vmatprep.subr.mxu0 0.0
    %628 = vmatpush1.msra.mxu0 0.0
    %629 = vmatprep.subr.mxu0 0.0
    %630 = vmatpush1.msra.mxu0 0.0
    %631 = vmatprep.subr.mxu0 0.0
    %632 = vmatpush1.msra.mxu0 0.0
    %633 = vmatprep.subr.mxu0 0.0
    %634 = vmatpush1.msra.mxu0 0.0
    %635 = vmatprep.subr.mxu0 0.0
    %636 = vmatpush1.msra.mxu0 0.0
    %637 = vmatprep.mubr.f32.mxu0 0.0
    %638 = vmatmul.mubr.f32.gmra.mrb[0].mxu0 %v568
    %v639 = vpop.f32.mrb[0].mxu0
    %v640 = vadd.f32 0.0, %v639
    %v641 = vpop.f32.mrb[0].mxu0
    %642 = vmatprep.mubr.f32.mxu0 0.0
    %643 = vmatmul.mubr.f32.gmra.mrb[0].mxu0 %v571
    %v644 = vpop.f32.mrb[0].mxu0
    %v645 = vadd.f32 0.0, %v644
    %v646 = vpop.f32.mrb[0].mxu0
    %647 = vdwg.mxu0
    %v649 = vsel %vm163, %v640, 0
    %v652 = vsel %vm163, %v645, 0
    %654 = vmatprep.subr.mxu0 0.0
    %655 = vmatpush1.msra.mxu0 %v146
    %656 = vmatprep.subr.mxu0 0.0
    %657 = vmatpush1.msra.mxu0 0.0
    %658 = vmatprep.subr.mxu0 0.0
    %659 = vmatpush1.msra.mxu0 0.0
    %660 = vmatprep.subr.mxu0 0.0
    %661 = vmatpush1.msra.mxu0 0.0
    %662 = vmatprep.subr.mxu0 0.0
    %663 = vmatpush1.msra.mxu0 0.0
    %664 = vmatprep.subr.mxu0 0.0
    %665 = vmatpush1.msra.mxu0 0.0
    %666 = vmatprep.subr.mxu0 0.0
    %667 = vmatpush1.msra.mxu0 0.0
    %668 = vmatprep.subr.mxu0 0.0
    %669 = vmatpush1.msra.mxu0 0.0
    %670 = vmatprep.subr.mxu0 0.0
    %671 = vmatpush1.msra.mxu0 0.0
    %672 = vmatprep.subr.mxu0 0.0
    %673 = vmatpush1.msra.mxu0 0.0
    %674 = vmatprep.subr.mxu0 0.0
    %675 = vmatpush1.msra.mxu0 0.0
    %676 = vmatprep.subr.mxu0 0.0
    %677 = vmatpush1.msra.mxu0 0.0
    %678 = vmatprep.subr.mxu0 0.0
    %679 = vmatpush1.msra.mxu0 0.0
    %680 = vmatprep.subr.mxu0 0.0
    %681 = vmatpush1.msra.mxu0 0.0
    %682 = vmatprep.subr.mxu0 0.0
    %683 = vmatpush1.msra.mxu0 0.0
    %684 = vmatprep.subr.mxu0 0.0
    %685 = vmatpush1.msra.mxu0 0.0
    %686 = vmatprep.subr.mxu0 0.0
    %687 = vmatpush1.msra.mxu0 0.0
    %688 = vmatprep.subr.mxu0 0.0
    %689 = vmatpush1.msra.mxu0 0.0
    %690 = vmatprep.subr.mxu0 0.0
    %691 = vmatpush1.msra.mxu0 0.0
    %692 = vmatprep.subr.mxu0 0.0
    %693 = vmatpush1.msra.mxu0 0.0
    %694 = vmatprep.subr.mxu0 0.0
    %695 = vmatpush1.msra.mxu0 0.0
    %696 = vmatprep.subr.mxu0 0.0
    %697 = vmatpush1.msra.mxu0 0.0
    %698 = vmatprep.subr.mxu0 0.0
    %699 = vmatpush1.msra.mxu0 0.0
    %700 = vmatprep.subr.mxu0 0.0
    %701 = vmatpush1.msra.mxu0 0.0
    %702 = vmatprep.subr.mxu0 0.0
    %703 = vmatpush1.msra.mxu0 0.0
    %704 = vmatprep.subr.mxu0 0.0
    %705 = vmatpush1.msra.mxu0 0.0
    %706 = vmatprep.subr.mxu0 0.0
    %707 = vmatpush1.msra.mxu0 0.0
    %708 = vmatprep.subr.mxu0 0.0
    %709 = vmatpush1.msra.mxu0 0.0
    %710 = vmatprep.subr.mxu0 0.0
    %711 = vmatpush1.msra.mxu0 0.0
    %712 = vmatprep.subr.mxu0 0.0
    %713 = vmatpush1.msra.mxu0 0.0
    %714 = vmatprep.subr.mxu0 0.0
    %715 = vmatpush1.msra.mxu0 0.0
    %716 = vmatprep.subr.mxu0 0.0
    %717 = vmatpush1.msra.mxu0 0.0
    %718 = vmatprep.mubr.f32.mxu0 0.0
    %719 = vmatmul.mubr.f32.gmra.mrb[0].mxu0 %v649
    %v720 = vpop.f32.mrb[0].mxu0
    %v721 = vadd.f32 0.0, %v720
    %v722 = vpop.f32.mrb[0].mxu0
    %723 = vmatprep.mubr.f32.mxu0 0.0
    %724 = vmatmul.mubr.f32.gmra.mrb[0].mxu0 %v652
    %v725 = vpop.f32.mrb[0].mxu0
    %v726 = vadd.f32 0.0, %v725
    %v727 = vpop.f32.mrb[0].mxu0
    %728 = vdwg.mxu0
    %v729 = vadd.f32 %v442, %v721
    %v730 = vadd.f32 %v443, %v726
    %731 = vrot.lane.b32.xlu0 %v137, 112
    %v732 = vpop.permute.xlu0 %731
    %733 = vrot.lane.b32.xlu0 %v142, 112
    %v734 = vpop.permute.xlu0 %733
    %735 = vrot.lane.b32.xlu0 %v137, 80
    %v736 = vpop.permute.xlu0 %735
    %737 = vrot.lane.b32.xlu0 %v142, 80
    %v738 = vpop.permute.xlu0 %737
    %v739 = vsel %vm163, %v732, 0
    %v741 = vsel %vm163, %v734, 0
    %v743 = vsel %vm163, %v736, 0
    %v745 = vsel %vm163, %v738, 0
    %747 = vmatprep.subr.mxu0 0.0
    %748 = vmatpush1.xpose.msra.mxu0 %v743
    %749 = vmatprep.subr.mxu0 0.0
    %750 = vmatpush1.xpose.msra.mxu0 %v745
    %751 = vmatprep.subr.mxu0 0.0
    %752 = vmatpush1.xpose.msra.mxu0 0.0
    %753 = vmatprep.subr.mxu0 0.0
    %754 = vmatpush1.xpose.msra.mxu0 0.0
    %755 = vmatprep.subr.mxu0 0.0
    %756 = vmatpush1.xpose.msra.mxu0 0.0
    %757 = vmatprep.subr.mxu0 0.0
    %758 = vmatpush1.xpose.msra.mxu0 0.0
    %759 = vmatprep.subr.mxu0 0.0
    %760 = vmatpush1.xpose.msra.mxu0 0.0
    %761 = vmatprep.subr.mxu0 0.0
    %762 = vmatpush1.xpose.msra.mxu0 0.0
    %763 = vmatprep.subr.mxu0 0.0
    %764 = vmatpush1.xpose.msra.mxu0 0.0
    %765 = vmatprep.subr.mxu0 0.0
    %766 = vmatpush1.xpose.msra.mxu0 0.0
    %767 = vmatprep.subr.mxu0 0.0
    %768 = vmatpush1.xpose.msra.mxu0 0.0
    %769 = vmatprep.subr.mxu0 0.0
    %770 = vmatpush1.xpose.msra.mxu0 0.0
    %771 = vmatprep.subr.mxu0 0.0
    %772 = vmatpush1.xpose.msra.mxu0 0.0
    %773 = vmatprep.subr.mxu0 0.0
    %774 = vmatpush1.xpose.msra.mxu0 0.0
    %775 = vmatprep.subr.mxu0 0.0
    %776 = vmatpush1.xpose.msra.mxu0 0.0
    %777 = vmatprep.subr.mxu0 0.0
    %778 = vmatpush1.xpose.msra.mxu0 0.0
    %779 = vmatprep.subr.mxu0 0.0
    %780 = vmatpush1.xpose.msra.mxu0 0.0
    %781 = vmatprep.subr.mxu0 0.0
    %782 = vmatpush1.xpose.msra.mxu0 0.0
    %783 = vmatprep.subr.mxu0 0.0
    %784 = vmatpush1.xpose.msra.mxu0 0.0
    %785 = vmatprep.subr.mxu0 0.0
    %786 = vmatpush1.xpose.msra.mxu0 0.0
    %787 = vmatprep.subr.mxu0 0.0
    %788 = vmatpush1.xpose.msra.mxu0 0.0
    %789 = vmatprep.subr.mxu0 0.0
    %790 = vmatpush1.xpose.msra.mxu0 0.0
    %791 = vmatprep.subr.mxu0 0.0
    %792 = vmatpush1.xpose.msra.mxu0 0.0
    %793 = vmatprep.subr.mxu0 0.0
    %794 = vmatpush1.xpose.msra.mxu0 0.0
    %795 = vmatprep.subr.mxu0 0.0
    %796 = vmatpush1.xpose.msra.mxu0 0.0
    %797 = vmatprep.subr.mxu0 0.0
    %798 = vmatpush1.xpose.msra.mxu0 0.0
    %799 = vmatprep.subr.mxu0 0.0
    %800 = vmatpush1.xpose.msra.mxu0 0.0
    %801 = vmatprep.subr.mxu0 0.0
    %802 = vmatpush1.xpose.msra.mxu0 0.0
    %803 = vmatprep.subr.mxu0 0.0
    %804 = vmatpush1.xpose.msra.mxu0 0.0
    %805 = vmatprep.subr.mxu0 0.0
    %806 = vmatpush1.xpose.msra.mxu0 0.0
    %807 = vmatprep.subr.mxu0 0.0
    %808 = vmatpush1.xpose.msra.mxu0 0.0
    %809 = vmatprep.subr.mxu0 0.0
    %810 = vmatpush1.xpose.msra.mxu0 0.0
    %811 = vmatprep.mubr.f32.mxu0 0.0
    %812 = vmatmul.mubr.f32.gmra.mrb[0].mxu0 %v739
    %v813 = vpop.f32.mrb[0].mxu0
    %v814 = vadd.f32 0.0, %v813
    %v815 = vpop.f32.mrb[0].mxu0
    %816 = vmatprep.mubr.f32.mxu0 0.0
    %817 = vmatmul.mubr.f32.gmra.mrb[0].mxu0 %v741
    %v818 = vpop.f32.mrb[0].mxu0
    %v819 = vadd.f32 0.0, %v818
    %v820 = vpop.f32.mrb[0].mxu0
    %821 = vdwg.mxu0
    %v822 = vmul.f32 %v814, 0.35355338
    %v823 = vmul.f32 %v819, 0.35355338
    %v824 = vadd.f32 %v822, %v50
    %v825 = vadd.f32 %v823, %v51
    %v826 = vsel %vm251, %v824, -inf
    %827 = vmax.xlane.f32.xlu0 %v826
    %v828 = vpop.xlane.xlu0 %827
    %v829 = vsel %vm251, %v825, -inf
    %830 = vmax.xlane.f32.xlu0 %v829
    %v831 = vpop.xlane.xlu0 %830
    %v832 = vsub.f32 %v824, %v828
    %v833 = vsub.f32 %v825, %v831
    %v834 = vmul.f32 %v832, 1.442695
    %v835 = vpow.pop %v834
    %v836 = vmul.f32 %v833, 1.442695
    %v837 = vpow.pop %v836
    %v838 = vsel %vm251, %v835, 0.0
    %839 = vadd.xlane.f32.xlu0 %v838
    %v840 = vpop.xlane.xlu0 %839
    %v841 = vsel %vm251, %v837, 0.0
    %842 = vadd.xlane.f32.xlu0 %v841
    %v843 = vpop.xlane.xlu0 %842
    %v844 = vrcp.pop %v840
    %v845 = vrcp.pop %v843
    %v846 = vmul.f32 %v835, %v844
    %v847 = vmul.f32 %v837, %v845
    %848 = vrot.lane.b32.xlu0 %v137, 48
    %v849 = vpop.permute.xlu0 %848
    %850 = vrot.lane.b32.xlu0 %v142, 48
    %v851 = vpop.permute.xlu0 %850
    %v855 = vsel %vm251, %v846, 0
    %v858 = vsel %vm251, %v847, 0
    %860 = vmatprep.subr.mxu0 0.0
    %861 = vmatpush1.msra.mxu0 %v849
    %862 = vmatprep.subr.mxu0 0.0
    %863 = vmatpush1.msra.mxu0 %v851
    %864 = vmatprep.subr.mxu0 0.0
    %865 = vmatpush1.msra.mxu0 0.0
    %866 = vmatprep.subr.mxu0 0.0
    %867 = vmatpush1.msra.mxu0 0.0
    %868 = vmatprep.subr.mxu0 0.0
    %869 = vmatpush1.msra.mxu0 0.0
    %870 = vmatprep.subr.mxu0 0.0
    %871 = vmatpush1.msra.mxu0 0.0
    %872 = vmatprep.subr.mxu0 0.0
    %873 = vmatpush1.msra.mxu0 0.0
    %874 = vmatprep.subr.mxu0 0.0
    %875 = vmatpush1.msra.mxu0 0.0
    %876 = vmatprep.subr.mxu0 0.0
    %877 = vmatpush1.msra.mxu0 0.0
    %878 = vmatprep.subr.mxu0 0.0
    %879 = vmatpush1.msra.mxu0 0.0
    %880 = vmatprep.subr.mxu0 0.0
    %881 = vmatpush1.msra.mxu0 0.0
    %882 = vmatprep.subr.mxu0 0.0
    %883 = vmatpush1.msra.mxu0 0.0
    %884 = vmatprep.subr.mxu0 0.0
    %885 = vmatpush1.msra.mxu0 0.0
    %886 = vmatprep.subr.mxu0 0.0
    %887 = vmatpush1.msra.mxu0 0.0
    %888 = vmatprep.subr.mxu0 0.0
    %889 = vmatpush1.msra.mxu0 0.0
    %890 = vmatprep.subr.mxu0 0.0
    %891 = vmatpush1.msra.mxu0 0.0
    %892 = vmatprep.subr.mxu0 0.0
    %893 = vmatpush1.msra.mxu0 0.0
    %894 = vmatprep.subr.mxu0 0.0
    %895 = vmatpush1.msra.mxu0 0.0
    %896 = vmatprep.subr.mxu0 0.0
    %897 = vmatpush1.msra.mxu0 0.0
    %898 = vmatprep.subr.mxu0 0.0
    %899 = vmatpush1.msra.mxu0 0.0
    %900 = vmatprep.subr.mxu0 0.0
    %901 = vmatpush1.msra.mxu0 0.0
    %902 = vmatprep.subr.mxu0 0.0
    %903 = vmatpush1.msra.mxu0 0.0
    %904 = vmatprep.subr.mxu0 0.0
    %905 = vmatpush1.msra.mxu0 0.0
    %906 = vmatprep.subr.mxu0 0.0
    %907 = vmatpush1.msra.mxu0 0.0
    %908 = vmatprep.subr.mxu0 0.0
    %909 = vmatpush1.msra.mxu0 0.0
    %910 = vmatprep.subr.mxu0 0.0
    %911 = vmatpush1.msra.mxu0 0.0
    %912 = vmatprep.subr.mxu0 0.0
    %913 = vmatpush1.msra.mxu0 0.0
    %914 = vmatprep.subr.mxu0 0.0
    %915 = vmatpush1.msra.mxu0 0.0
    %916 = vmatprep.subr.mxu0 0.0
    %917 = vmatpush1.msra.mxu0 0.0
    %918 = vmatprep.subr.mxu0 0.0
    %919 = vmatpush1.msra.mxu0 0.0
    %920 = vmatprep.subr.mxu0 0.0
    %921 = vmatpush1.msra.mxu0 0.0
    %922 = vmatprep.subr.mxu0 0.0
    %923 = vmatpush1.msra.mxu0 0.0
    %924 = vmatprep.mubr.f32.mxu0 0.0
    %925 = vmatmul.mubr.f32.gmra.mrb[0].mxu0 %v855
    %v926 = vpop.f32.mrb[0].mxu0
    %v927 = vadd.f32 0.0, %v926
    %v928 = vpop.f32.mrb[0].mxu0
    %929 = vmatprep.mubr.f32.mxu0 0.0
    %930 = vmatmul.mubr.f32.gmra.mrb[0].mxu0 %v858
    %v931 = vpop.f32.mrb[0].mxu0
    %v932 = vadd.f32 0.0, %v931
    %v933 = vpop.f32.mrb[0].mxu0
    %934 = vdwg.mxu0
    %v936 = vsel %vm163, %v927, 0
    %v939 = vsel %vm163, %v932, 0
    %941 = vmatprep.subr.mxu0 0.0
    %942 = vmatpush1.msra.mxu0 %v147
    %943 = vmatprep.subr.mxu0 0.0
    %944 = vmatpush1.msra.mxu0 0.0
    %945 = vmatprep.subr.mxu0 0.0
    %946 = vmatpush1.msra.mxu0 0.0
    %947 = vmatprep.subr.mxu0 0.0
    %948 = vmatpush1.msra.mxu0 0.0
    %949 = vmatprep.subr.mxu0 0.0
    %950 = vmatpush1.msra.mxu0 0.0
    %951 = vmatprep.subr.mxu0 0.0
    %952 = vmatpush1.msra.mxu0 0.0
    %953 = vmatprep.subr.mxu0 0.0
    %954 = vmatpush1.msra.mxu0 0.0
    %955 = vmatprep.subr.mxu0 0.0
    %956 = vmatpush1.msra.mxu0 0.0
    %957 = vmatprep.subr.mxu0 0.0
    %958 = vmatpush1.msra.mxu0 0.0
    %959 = vmatprep.subr.mxu0 0.0
    %960 = vmatpush1.msra.mxu0 0.0
    %961 = vmatprep.subr.mxu0 0.0
    %962 = vmatpush1.msra.mxu0 0.0
    %963 = vmatprep.subr.mxu0 0.0
    %964 = vmatpush1.msra.mxu0 0.0
    %965 = vmatprep.subr.mxu0 0.0
    %966 = vmatpush1.msra.mxu0 0.0
    %967 = vmatprep.subr.mxu0 0.0
    %968 = vmatpush1.msra.mxu0 0.0
    %969 = vmatprep.subr.mxu0 0.0
    %970 = vmatpush1.msra.mxu0 0.0
    %971 = vmatprep.subr.mxu0 0.0
    %972 = vmatpush1.msra.mxu0 0.0
    %973 = vmatprep.subr.mxu0 0.0
    %974 = vmatpush1.msra.mxu0 0.0
    %975 = vmatprep.subr.mxu0 0.0
    %976 = vmatpush1.msra.mxu0 0.0
    %977 = vmatprep.subr.mxu0 0.0
    %978 = vmatpush1.msra.mxu0 0.0
    %979 = vmatprep.subr.mxu0 0.0
    %980 = vmatpush1.msra.mxu0 0.0
    %981 = vmatprep.subr.mxu0 0.0
    %982 = vmatpush1.msra.mxu0 0.0
    %983 = vmatprep.subr.mxu0 0.0
    %984 = vmatpush1.msra.mxu0 0.0
    %985 = vmatprep.subr.mxu0 0.0
    %986 = vmatpush1.msra.mxu0 0.0
    %987 = vmatprep.subr.mxu0 0.0
    %988 = vmatpush1.msra.mxu0 0.0
    %989 = vmatprep.subr.mxu0 0.0
    %990 = vmatpush1.msra.mxu0 0.0
    %991 = vmatprep.subr.mxu0 0.0
    %992 = vmatpush1.msra.mxu0 0.0
    %993 = vmatprep.subr.mxu0 0.0
    %994 = vmatpush1.msra.mxu0 0.0
    %995 = vmatprep.subr.mxu0 0.0
    %996 = vmatpush1.msra.mxu0 0.0
    %997 = vmatprep.subr.mxu0 0.0
    %998 = vmatpush1.msra.mxu0 0.0
    %999 = vmatprep.subr.mxu0 0.0
    %1000 = vmatpush1.msra.mxu0 0.0
    %1001 = vmatprep.subr.mxu0 0.0
    %1002 = vmatpush1.msra.mxu0 0.0
    %1003 = vmatprep.subr.mxu0 0.0
    %1004 = vmatpush1.msra.mxu0 0.0
    %1005 = vmatprep.mubr.f32.mxu0 0.0
    %1006 = vmatmul.mubr.f32.gmra.mrb[0].mxu0 %v936
    %v1007 = vpop.f32.mrb[0].mxu0
    %v1008 = vadd.f32 0.0, %v1007
    %v1009 = vpop.f32.mrb[0].mxu0
    %1010 = vmatprep.mubr.f32.mxu0 0.0
    %1011 = vmatmul.mubr.f32.gmra.mrb[0].mxu0 %v939
    %v1012 = vpop.f32.mrb[0].mxu0
    %v1013 = vadd.f32 0.0, %v1012
    %v1014 = vpop.f32.mrb[0].mxu0
    %1015 = vdwg.mxu0
    %v1016 = vadd.f32 %v729, %v1008
    %v1017 = vadd.f32 %v730, %v1013
    %1018 = vrot.lane.b32.xlu0 %v137, 104
    %v1019 = vpop.permute.xlu0 %1018
    %1020 = vrot.lane.b32.xlu0 %v142, 104
    %v1021 = vpop.permute.xlu0 %1020
    %1022 = vrot.lane.b32.xlu0 %v137, 72
    %v1023 = vpop.permute.xlu0 %1022
    %1024 = vrot.lane.b32.xlu0 %v142, 72
    %v1025 = vpop.permute.xlu0 %1024
    %v1026 = vsel %vm163, %v1019, 0
    %v1028 = vsel %vm163, %v1021, 0
    %v1030 = vsel %vm163, %v1023, 0
    %v1032 = vsel %vm163, %v1025, 0
    %1034 = vmatprep.subr.mxu0 0.0
    %1035 = vmatpush1.xpose.msra.mxu0 %v1030
    %1036 = vmatprep.subr.mxu0 0.0
    %1037 = vmatpush1.xpose.msra.mxu0 %v1032
    %1038 = vmatprep.subr.mxu0 0.0
    %1039 = vmatpush1.xpose.msra.mxu0 0.0
    %1040 = vmatprep.subr.mxu0 0.0
    %1041 = vmatpush1.xpose.msra.mxu0 0.0
    %1042 = vmatprep.subr.mxu0 0.0
    %1043 = vmatpush1.xpose.msra.mxu0 0.0
    %1044 = vmatprep.subr.mxu0 0.0
    %1045 = vmatpush1.xpose.msra.mxu0 0.0
    %1046 = vmatprep.subr.mxu0 0.0
    %1047 = vmatpush1.xpose.msra.mxu0 0.0
    %1048 = vmatprep.subr.mxu0 0.0
    %1049 = vmatpush1.xpose.msra.mxu0 0.0
    %1050 = vmatprep.subr.mxu0 0.0
    %1051 = vmatpush1.xpose.msra.mxu0 0.0
    %1052 = vmatprep.subr.mxu0 0.0
    %1053 = vmatpush1.xpose.msra.mxu0 0.0
    %1054 = vmatprep.subr.mxu0 0.0
    %1055 = vmatpush1.xpose.msra.mxu0 0.0
    %1056 = vmatprep.subr.mxu0 0.0
    %1057 = vmatpush1.xpose.msra.mxu0 0.0
    %1058 = vmatprep.subr.mxu0 0.0
    %1059 = vmatpush1.xpose.msra.mxu0 0.0
    %1060 = vmatprep.subr.mxu0 0.0
    %1061 = vmatpush1.xpose.msra.mxu0 0.0
    %1062 = vmatprep.subr.mxu0 0.0
    %1063 = vmatpush1.xpose.msra.mxu0 0.0
    %1064 = vmatprep.subr.mxu0 0.0
    %1065 = vmatpush1.xpose.msra.mxu0 0.0
    %1066 = vmatprep.subr.mxu0 0.0
    %1067 = vmatpush1.xpose.msra.mxu0 0.0
    %1068 = vmatprep.subr.mxu0 0.0
    %1069 = vmatpush1.xpose.msra.mxu0 0.0
    %1070 = vmatprep.subr.mxu0 0.0
    %1071 = vmatpush1.xpose.msra.mxu0 0.0
    %1072 = vmatprep.subr.mxu0 0.0
    %1073 = vmatpush1.xpose.msra.mxu0 0.0
    %1074 = vmatprep.subr.mxu0 0.0
    %1075 = vmatpush1.xpose.msra.mxu0 0.0
    %1076 = vmatprep.subr.mxu0 0.0
    %1077 = vmatpush1.xpose.msra.mxu0 0.0
    %1078 = vmatprep.subr.mxu0 0.0
    %1079 = vmatpush1.xpose.msra.mxu0 0.0
    %1080 = vmatprep.subr.mxu0 0.0
    %1081 = vmatpush1.xpose.msra.mxu0 0.0
    %1082 = vmatprep.subr.mxu0 0.0
    %1083 = vmatpush1.xpose.msra.mxu0 0.0
    %1084 = vmatprep.subr.mxu0 0.0
    %1085 = vmatpush1.xpose.msra.mxu0 0.0
    %1086 = vmatprep.subr.mxu0 0.0
    %1087 = vmatpush1.xpose.msra.mxu0 0.0
    %1088 = vmatprep.subr.mxu0 0.0
    %1089 = vmatpush1.xpose.msra.mxu0 0.0
    %1090 = vmatprep.subr.mxu0 0.0
    %1091 = vmatpush1.xpose.msra.mxu0 0.0
    %1092 = vmatprep.subr.mxu0 0.0
    %1093 = vmatpush1.xpose.msra.mxu0 0.0
    %1094 = vmatprep.subr.mxu0 0.0
    %1095 = vmatpush1.xpose.msra.mxu0 0.0
    %1096 = vmatprep.subr.mxu0 0.0
    %1097 = vmatpush1.xpose.msra.mxu0 0.0
    %1098 = vmatprep.mubr.f32.mxu0 0.0
    %1099 = vmatmul.mubr.f32.gmra.mrb[0].mxu0 %v1026
    %v1100 = vpop.f32.mrb[0].mxu0
    %v1101 = vadd.f32 0.0, %v1100
    %v1102 = vpop.f32.mrb[0].mxu0
    %1103 = vmatprep.mubr.f32.mxu0 0.0
    %1104 = vmatmul.mubr.f32.gmra.mrb[0].mxu0 %v1028
    %v1105 = vpop.f32.mrb[0].mxu0
    %v1106 = vadd.f32 0.0, %v1105
    %v1107 = vpop.f32.mrb[0].mxu0
    %1108 = vdwg.mxu0
    %v1109 = vmul.f32 %v1101, 0.35355338
    %v1110 = vmul.f32 %v1106, 0.35355338
    %v1111 = vadd.f32 %v1109, %v50
    %v1112 = vadd.f32 %v1110, %v51
    %v1113 = vsel %vm251, %v1111, -inf
    %1114 = vmax.xlane.f32.xlu0 %v1113
    %v1115 = vpop.xlane.xlu0 %1114
    %v1116 = vsel %vm251, %v1112, -inf
    %1117 = vmax.xlane.f32.xlu0 %v1116
    %v1118 = vpop.xlane.xlu0 %1117
    %v1119 = vsub.f32 %v1111, %v1115
    %v1120 = vsub.f32 %v1112, %v1118
    %v1121 = vmul.f32 %v1119, 1.442695
    %v1122 = vpow.pop %v1121
    %v1123 = vmul.f32 %v1120, 1.442695
    %v1124 = vpow.pop %v1123
    %v1125 = vsel %vm251, %v1122, 0.0
    %1126 = vadd.xlane.f32.xlu0 %v1125
    %v1127 = vpop.xlane.xlu0 %1126
    %v1128 = vsel %vm251, %v1124, 0.0
    %1129 = vadd.xlane.f32.xlu0 %v1128
    %v1130 = vpop.xlane.xlu0 %1129
    %v1131 = vrcp.pop %v1127
    %v1132 = vrcp.pop %v1130
    %v1133 = vmul.f32 %v1122, %v1131
    %v1134 = vmul.f32 %v1124, %v1132
    %1135 = vrot.lane.b32.xlu0 %v137, 40
    %v1136 = vpop.permute.xlu0 %1135
    %1137 = vrot.lane.b32.xlu0 %v142, 40
    %v1138 = vpop.permute.xlu0 %1137
    %v1142 = vsel %vm251, %v1133, 0
    %v1145 = vsel %vm251, %v1134, 0
    %1147 = vmatprep.subr.mxu0 0.0
    %1148 = vmatpush1.msra.mxu0 %v1136
    %1149 = vmatprep.subr.mxu0 0.0
    %1150 = vmatpush1.msra.mxu0 %v1138
    %1151 = vmatprep.subr.mxu0 0.0
    %1152 = vmatpush1.msra.mxu0 0.0
    %1153 = vmatprep.subr.mxu0 0.0
    %1154 = vmatpush1.msra.mxu0 0.0
    %1155 = vmatprep.subr.mxu0 0.0
    %1156 = vmatpush1.msra.mxu0 0.0
    %1157 = vmatprep.subr.mxu0 0.0
    %1158 = vmatpush1.msra.mxu0 0.0
    %1159 = vmatprep.subr.mxu0 0.0
    %1160 = vmatpush1.msra.mxu0 0.0
    %1161 = vmatprep.subr.mxu0 0.0
    %1162 = vmatpush1.msra.mxu0 0.0
    %1163 = vmatprep.subr.mxu0 0.0
    %1164 = vmatpush1.msra.mxu0 0.0
    %1165 = vmatprep.subr.mxu0 0.0
    %1166 = vmatpush1.msra.mxu0 0.0
    %1167 = vmatprep.subr.mxu0 0.0
    %1168 = vmatpush1.msra.mxu0 0.0
    %1169 = vmatprep.subr.mxu0 0.0
    %1170 = vmatpush1.msra.mxu0 0.0
    %1171 = vmatprep.subr.mxu0 0.0
    %1172 = vmatpush1.msra.mxu0 0.0
    %1173 = vmatprep.subr.mxu0 0.0
    %1174 = vmatpush1.msra.mxu0 0.0
    %1175 = vmatprep.subr.mxu0 0.0
    %1176 = vmatpush1.msra.mxu0 0.0
    %1177 = vmatprep.subr.mxu0 0.0
    %1178 = vmatpush1.msra.mxu0 0.0
    %1179 = vmatprep.subr.mxu0 0.0
    %1180 = vmatpush1.msra.mxu0 0.0
    %1181 = vmatprep.subr.mxu0 0.0
    %1182 = vmatpush1.msra.mxu0 0.0
    %1183 = vmatprep.subr.mxu0 0.0
    %1184 = vmatpush1.msra.mxu0 0.0
    %1185 = vmatprep.subr.mxu0 0.0
    %1186 = vmatpush1.msra.mxu0 0.0
    %1187 = vmatprep.subr.mxu0 0.0
    %1188 = vmatpush1.msra.mxu0 0.0
    %1189 = vmatprep.subr.mxu0 0.0
    %1190 = vmatpush1.msra.mxu0 0.0
    %1191 = vmatprep.subr.mxu0 0.0
    %1192 = vmatpush1.msra.mxu0 0.0
    %1193 = vmatprep.subr.mxu0 0.0
    %1194 = vmatpush1.msra.mxu0 0.0
    %1195 = vmatprep.subr.mxu0 0.0
    %1196 = vmatpush1.msra.mxu0 0.0
    %1197 = vmatprep.subr.mxu0 0.0
    %1198 = vmatpush1.msra.mxu0 0.0
    %1199 = vmatprep.subr.mxu0 0.0
    %1200 = vmatpush1.msra.mxu0 0.0
    %1201 = vmatprep.subr.mxu0 0.0
    %1202 = vmatpush1.msra.mxu0 0.0
    %1203 = vmatprep.subr.mxu0 0.0
    %1204 = vmatpush1.msra.mxu0 0.0
    %1205 = vmatprep.subr.mxu0 0.0
    %1206 = vmatpush1.msra.mxu0 0.0
    %1207 = vmatprep.subr.mxu0 0.0
    %1208 = vmatpush1.msra.mxu0 0.0
    %1209 = vmatprep.subr.mxu0 0.0
    %1210 = vmatpush1.msra.mxu0 0.0
    %1211 = vmatprep.mubr.f32.mxu0 0.0
    %1212 = vmatmul.mubr.f32.gmra.mrb[0].mxu0 %v1142
    %v1213 = vpop.f32.mrb[0].mxu0
    %v1214 = vadd.f32 0.0, %v1213
    %v1215 = vpop.f32.mrb[0].mxu0
    %1216 = vmatprep.mubr.f32.mxu0 0.0
    %1217 = vmatmul.mubr.f32.gmra.mrb[0].mxu0 %v1145
    %v1218 = vpop.f32.mrb[0].mxu0
    %v1219 = vadd.f32 0.0, %v1218
    %v1220 = vpop.f32.mrb[0].mxu0
    %1221 = vdwg.mxu0
    %v1223 = vsel %vm163, %v1214, 0
    %v1226 = vsel %vm163, %v1219, 0
    %1228 = vmatprep.subr.mxu0 0.0
    %1229 = vmatpush1.msra.mxu0 %v148
    %1230 = vmatprep.subr.mxu0 0.0
    %1231 = vmatpush1.msra.mxu0 0.0
    %1232 = vmatprep.subr.mxu0 0.0
    %1233 = vmatpush1.msra.mxu0 0.0
    %1234 = vmatprep.subr.mxu0 0.0
    %1235 = vmatpush1.msra.mxu0 0.0
    %1236 = vmatprep.subr.mxu0 0.0
    %1237 = vmatpush1.msra.mxu0 0.0
    %1238 = vmatprep.subr.mxu0 0.0
    %1239 = vmatpush1.msra.mxu0 0.0
    %1240 = vmatprep.subr.mxu0 0.0
    %1241 = vmatpush1.msra.mxu0 0.0
    %1242 = vmatprep.subr.mxu0 0.0
    %1243 = vmatpush1.msra.mxu0 0.0
    %1244 = vmatprep.subr.mxu0 0.0
    %1245 = vmatpush1.msra.mxu0 0.0
    %1246 = vmatprep.subr.mxu0 0.0
    %1247 = vmatpush1.msra.mxu0 0.0
    %1248 = vmatprep.subr.mxu0 0.0
    %1249 = vmatpush1.msra.mxu0 0.0
    %1250 = vmatprep.subr.mxu0 0.0
    %1251 = vmatpush1.msra.mxu0 0.0
    %1252 = vmatprep.subr.mxu0 0.0
    %1253 = vmatpush1.msra.mxu0 0.0
    %1254 = vmatprep.subr.mxu0 0.0
    %1255 = vmatpush1.msra.mxu0 0.0
    %1256 = vmatprep.subr.mxu0 0.0
    %1257 = vmatpush1.msra.mxu0 0.0
    %1258 = vmatprep.subr.mxu0 0.0
    %1259 = vmatpush1.msra.mxu0 0.0
    %1260 = vmatprep.subr.mxu0 0.0
    %1261 = vmatpush1.msra.mxu0 0.0
    %1262 = vmatprep.subr.mxu0 0.0
    %1263 = vmatpush1.msra.mxu0 0.0
    %1264 = vmatprep.subr.mxu0 0.0
    %1265 = vmatpush1.msra.mxu0 0.0
    %1266 = vmatprep.subr.mxu0 0.0
    %1267 = vmatpush1.msra.mxu0 0.0
    %1268 = vmatprep.subr.mxu0 0.0
    %1269 = vmatpush1.msra.mxu0 0.0
    %1270 = vmatprep.subr.mxu0 0.0
    %1271 = vmatpush1.msra.mxu0 0.0
    %1272 = vmatprep.subr.mxu0 0.0
    %1273 = vmatpush1.msra.mxu0 0.0
    %1274 = vmatprep.subr.mxu0 0.0
    %1275 = vmatpush1.msra.mxu0 0.0
    %1276 = vmatprep.subr.mxu0 0.0
    %1277 = vmatpush1.msra.mxu0 0.0
    %1278 = vmatprep.subr.mxu0 0.0
    %1279 = vmatpush1.msra.mxu0 0.0
    %1280 = vmatprep.subr.mxu0 0.0
    %1281 = vmatpush1.msra.mxu0 0.0
    %1282 = vmatprep.subr.mxu0 0.0
    %1283 = vmatpush1.msra.mxu0 0.0
    %1284 = vmatprep.subr.mxu0 0.0
    %1285 = vmatpush1.msra.mxu0 0.0
    %1286 = vmatprep.subr.mxu0 0.0
    %1287 = vmatpush1.msra.mxu0 0.0
    %1288 = vmatprep.subr.mxu0 0.0
    %1289 = vmatpush1.msra.mxu0 0.0
    %1290 = vmatprep.subr.mxu0 0.0
    %1291 = vmatpush1.msra.mxu0 0.0
    %1292 = vmatprep.mubr.f32.mxu0 0.0
    %1293 = vmatmul.mubr.f32.gmra.mrb[0].mxu0 %v1223
    %v1294 = vpop.f32.mrb[0].mxu0
    %v1295 = vadd.f32 0.0, %v1294
    %v1296 = vpop.f32.mrb[0].mxu0
    %1297 = vmatprep.mubr.f32.mxu0 0.0
    %1298 = vmatmul.mubr.f32.gmra.mrb[0].mxu0 %v1226
    %v1299 = vpop.f32.mrb[0].mxu0
    %v1300 = vadd.f32 0.0, %v1299
    %v1301 = vpop.f32.mrb[0].mxu0
    %1302 = vdwg.mxu0
    %v1303 = vadd.f32 %v1016, %v1295
    %v1304 = vadd.f32 %v1017, %v1300
    %v1305 = vadd.f32 %v48, %v1303
    %v1306 = vadd.f32 %v49, %v1304
    %v1307 = vld [vmem:[%s10] sm:$0x1]
    %v1308 = vld [vmem:[%s11] sm:$0x1]
    %v1309 = vsel %vm63, %v1305, 0.0
    %1310 = vadd.xlane.f32.xlu0 %v1309
    %v1311 = vpop.xlane.xlu0 %1310
    %v1312 = vsel %vm63, %v1306, 0.0
    %1313 = vadd.xlane.f32.xlu0 %v1312
    %v1314 = vpop.xlane.xlu0 %1313
    %v1315 = vrcp.pop 32.0
    %v1316 = vmul.f32 %v1311, %v1315
    %v1317 = vmul.f32 %v1314, %v1315
    %v1318 = vsub.f32 %v1305, %v1316
    %v1319 = vsub.f32 %v1306, %v1317
    %v1320 = vmul.f32 %v1318, %v1318
    %v1321 = vmul.f32 %v1319, %v1319
    %v1322 = vsel %vm63, %v1320, 0.0
    %1323 = vadd.xlane.f32.xlu0 %v1322
    %v1324 = vpop.xlane.xlu0 %1323
    %v1325 = vsel %vm63, %v1321, 0.0
    %1326 = vadd.xlane.f32.xlu0 %v1325
    %v1327 = vpop.xlane.xlu0 %1326
    %v1328 = vmul.f32 %v1324, %v1315
    %v1329 = vmul.f32 %v1327, %v1315
    %v1330 = vadd.f32 %v1328, 1e-05
    %v1331 = vadd.f32 %v1329, 1e-05
    %v1332 = vrsqrt.pop %v1330
    %v1333 = vrsqrt.pop %v1331
    %v1334 = vmul.f32 %v1318, %v1332
    %v1335 = vmul.f32 %v1319, %v1333
    %v1337 = vlaneseq
    %v1338 = vshrl.u32 %v1337, 7
    %v1339 = vsub.s32 0, %v1338
    %v1340 = vrot.slane %v1307, %v1339
    %v1342 = vmul.f32 %v1334, %v1340
    %v1343 = vmul.f32 %v1335, %v1340
    %v1345 = vlaneseq
    %v1346 = vshrl.u32 %v1345, 7
    %v1347 = vsub.s32 0, %v1346
    %v1348 = vrot.slane %v1308, %v1347
    %v1350 = vadd.f32 %v1342, %v1348
    %v1351 = vadd.f32 %v1343, %v1348
    %v1352 = vld [vmem:[%s6] sm:$0xff]
    %v1353 = vld [vmem:[%s6 + $0x8] sm:$0xff]
    %v1354 = vld [vmem:[%s6 + $0x10] sm:$0xff]
    %v1355 = vld [vmem:[%s6 + $0x18] sm:$0xff]
    %v1356 = vld [vmem:[%s7] sm:$0x1]
    %v1358 = vlaneseq
    %v1359 = vshrl.u32 %v1358, 7
    %v1360 = vsub.s32 0, %v1359
    %v1361 = vrot.slane %v1356, %v1360
    %v1364 = vsel %vm63, %v1350, 0
    %v1367 = vsel %vm63, %v1351, 0
    %1369 = vmatprep.subr.mxu0 0.0
    %1370 = vmatpush1.msra.mxu0 %v1352
    %1371 = vmatprep.subr.mxu0 0.0
    %1372 = vmatpush1.msra.mxu0 %v1353
    %1373 = vmatprep.subr.mxu0 0.0
    %1374 = vmatpush1.msra.mxu0 %v1354
    %1375 = vmatprep.subr.mxu0 0.0
    %1376 = vmatpush1.msra.mxu0 %v1355
    %1377 = vmatprep.subr.mxu0 0.0
    %1378 = vmatpush1.msra.mxu0 0.0
    %1379 = vmatprep.subr.mxu0 0.0
    %1380 = vmatpush1.msra.mxu0 0.0
    %1381 = vmatprep.subr.mxu0 0.0
    %1382 = vmatpush1.msra.mxu0 0.0
    %1383 = vmatprep.subr.mxu0 0.0
    %1384 = vmatpush1.msra.mxu0 0.0
    %1385 = vmatprep.subr.mxu0 0.0
    %1386 = vmatpush1.msra.mxu0 0.0
    %1387 = vmatprep.subr.mxu0 0.0
    %1388 = vmatpush1.msra.mxu0 0.0
    %1389 = vmatprep.subr.mxu0 0.0
    %1390 = vmatpush1.msra.mxu0 0.0
    %1391 = vmatprep.subr.mxu0 0.0
    %1392 = vmatpush1.msra.mxu0 0.0
    %1393 = vmatprep.subr.mxu0 0.0
    %1394 = vmatpush1.msra.mxu0 0.0
    %1395 = vmatprep.subr.mxu0 0.0
    %1396 = vmatpush1.msra.mxu0 0.0
    %1397 = vmatprep.subr.mxu0 0.0
    %1398 = vmatpush1.msra.mxu0 0.0
    %1399 = vmatprep.subr.mxu0 0.0
    %1400 = vmatpush1.msra.mxu0 0.0
    %1401 = vmatprep.subr.mxu0 0.0
    %1402 = vmatpush1.msra.mxu0 0.0
    %1403 = vmatprep.subr.mxu0 0.0
    %1404 = vmatpush1.msra.mxu0 0.0
    %1405 = vmatprep.subr.mxu0 0.0
    %1406 = vmatpush1.msra.mxu0 0.0
    %1407 = vmatprep.subr.mxu0 0.0
    %1408 = vmatpush1.msra.mxu0 0.0
    %1409 = vmatprep.subr.mxu0 0.0
    %1410 = vmatpush1.msra.mxu0 0.0
    %1411 = vmatprep.subr.mxu0 0.0
    %1412 = vmatpush1.msra.mxu0 0.0
    %1413 = vmatprep.subr.mxu0 0.0
    %1414 = vmatpush1.msra.mxu0 0.0
    %1415 = vmatprep.subr.mxu0 0.0
    %1416 = vmatpush1.msra.mxu0 0.0
    %1417 = vmatprep.subr.mxu0 0.0
    %1418 = vmatpush1.msra.mxu0 0.0
    %1419 = vmatprep.subr.mxu0 0.0
    %1420 = vmatpush1.msra.mxu0 0.0
    %1421 = vmatprep.subr.mxu0 0.0
    %1422 = vmatpush1.msra.mxu0 0.0
    %1423 = vmatprep.subr.mxu0 0.0
    %1424 = vmatpush1.msra.mxu0 0.0
    %1425 = vmatprep.subr.mxu0 0.0
    %1426 = vmatpush1.msra.mxu0 0.0
    %1427 = vmatprep.subr.mxu0 0.0
    %1428 = vmatpush1.msra.mxu0 0.0
    %1429 = vmatprep.subr.mxu0 0.0
    %1430 = vmatpush1.msra.mxu0 0.0
    %1431 = vmatprep.subr.mxu0 0.0
    %1432 = vmatpush1.msra.mxu0 0.0
    %1433 = vmatprep.mubr.f32.mxu0 0.0
    %1434 = vmatmul.mubr.f32.gmra.mrb[0].mxu0 %v1364
    %v1435 = vpop.f32.mrb[0].mxu0
    %v1436 = vadd.f32 %v1361, %v1435
    %v1437 = vpop.f32.mrb[0].mxu0
    %1438 = vmatprep.mubr.f32.mxu0 0.0
    %1439 = vmatmul.mubr.f32.gmra.mrb[0].mxu0 %v1367
    %v1440 = vpop.f32.mrb[0].mxu0
    %v1441 = vadd.f32 %v1361, %v1440
    %v1442 = vpop.f32.mrb[0].mxu0
    %1443 = vdwg.mxu0
    %v1444 = vmax.f32 %v1436, 0.0
    %v1445 = vmax.f32 %v1441, 0.0
    %v1446 = vld [vmem:[%s8] sm:$0xff]
    %v1447 = vld [vmem:[%s8 + $0x8] sm:$0xff]
    %v1448 = vld [vmem:[%s8 + $0x10] sm:$0xff]
    %v1449 = vld [vmem:[%s8 + $0x18] sm:$0xff]
    %v1450 = vld [vmem:[%s8 + $0x20] sm:$0xff]
    %v1451 = vld [vmem:[%s8 + $0x28] sm:$0xff]
    %v1452 = vld [vmem:[%s8 + $0x30] sm:$0xff]
    %v1453 = vld [vmem:[%s8 + $0x38] sm:$0xff]
    %v1454 = vld [vmem:[%s9] sm:$0x1]
    %v1456 = vlaneseq
    %v1457 = vshrl.u32 %v1456, 7
    %v1458 = vsub.s32 0, %v1457
    %v1459 = vrot.slane %v1454, %v1458
    %vm1461 = vcmask 523264
    %v1463 = vsel %vm1461, %v1444, 0
    %v1466 = vsel %vm1461, %v1445, 0
    %1468 = vmatprep.subr.mxu0 0.0
    %1469 = vmatpush1.msra.mxu0 %v1446
    %1470 = vmatprep.subr.mxu0 0.0
    %1471 = vmatpush1.msra.mxu0 %v1447
    %1472 = vmatprep.subr.mxu0 0.0
    %1473 = vmatpush1.msra.mxu0 %v1448
    %1474 = vmatprep.subr.mxu0 0.0
    %1475 = vmatpush1.msra.mxu0 %v1449
    %1476 = vmatprep.subr.mxu0 0.0
    %1477 = vmatpush1.msra.mxu0 %v1450
    %1478 = vmatprep.subr.mxu0 0.0
    %1479 = vmatpush1.msra.mxu0 %v1451
    %1480 = vmatprep.subr.mxu0 0.0
    %1481 = vmatpush1.msra.mxu0 %v1452
    %1482 = vmatprep.subr.mxu0 0.0
    %1483 = vmatpush1.msra.mxu0 %v1453
    %1484 = vmatprep.subr.mxu0 0.0
    %1485 = vmatpush1.msra.mxu0 0.0
    %1486 = vmatprep.subr.mxu0 0.0
    %1487 = vmatpush1.msra.mxu0 0.0
    %1488 = vmatprep.subr.mxu0 0.0
    %1489 = vmatpush1.msra.mxu0 0.0
    %1490 = vmatprep.subr.mxu0 0.0
    %1491 = vmatpush1.msra.mxu0 0.0
    %1492 = vmatprep.subr.mxu0 0.0
    %1493 = vmatpush1.msra.mxu0 0.0
    %1494 = vmatprep.subr.mxu0 0.0
    %1495 = vmatpush1.msra.mxu0 0.0
    %1496 = vmatprep.subr.mxu0 0.0
    %1497 = vmatpush1.msra.mxu0 0.0
    %1498 = vmatprep.subr.mxu0 0.0
    %1499 = vmatpush1.msra.mxu0 0.0
    %1500 = vmatprep.subr.mxu0 0.0
    %1501 = vmatpush1.msra.mxu0 0.0
    %1502 = vmatprep.subr.mxu0 0.0
    %1503 = vmatpush1.msra.mxu0 0.0
    %1504 = vmatprep.subr.mxu0 0.0
    %1505 = vmatpush1.msra.mxu0 0.0
    %1506 = vmatprep.subr.mxu0 0.0
    %1507 = vmatpush1.msra.mxu0 0.0
    %1508 = vmatprep.subr.mxu0 0.0
    %1509 = vmatpush1.msra.mxu0 0.0
    %1510 = vmatprep.subr.mxu0 0.0
    %1511 = vmatpush1.msra.mxu0 0.0
    %1512 = vmatprep.subr.mxu0 0.0
    %1513 = vmatpush1.msra.mxu0 0.0
    %1514 = vmatprep.subr.mxu0 0.0
    %1515 = vmatpush1.msra.mxu0 0.0
    %1516 = vmatprep.subr.mxu0 0.0
    %1517 = vmatpush1.msra.mxu0 0.0
    %1518 = vmatprep.subr.mxu0 0.0
    %1519 = vmatpush1.msra.mxu0 0.0
    %1520 = vmatprep.subr.mxu0 0.0
    %1521 = vmatpush1.msra.mxu0 0.0
    %1522 = vmatprep.subr.mxu0 0.0
    %1523 = vmatpush1.msra.mxu0 0.0
    %1524 = vmatprep.subr.mxu0 0.0
    %1525 = vmatpush1.msra.mxu0 0.0
    %1526 = vmatprep.subr.mxu0 0.0
    %1527 = vmatpush1.msra.mxu0 0.0
    %1528 = vmatprep.subr.mxu0 0.0
    %1529 = vmatpush1.msra.mxu0 0.0
    %1530 = vmatprep.subr.mxu0 0.0
    %1531 = vmatpush1.msra.mxu0 0.0
    %1532 = vmatprep.mubr.f32.mxu0 0.0
    %1533 = vmatmul.mubr.f32.gmra.mrb[0].mxu0 %v1463
    %v1534 = vpop.f32.mrb[0].mxu0
    %v1535 = vadd.f32 %v1459, %v1534
    %v1536 = vpop.f32.mrb[0].mxu0
    %1537 = vmatprep.mubr.f32.mxu0 0.0
    %1538 = vmatmul.mubr.f32.gmra.mrb[0].mxu0 %v1466
    %v1539 = vpop.f32.mrb[0].mxu0
    %v1540 = vadd.f32 %v1459, %v1539
    %v1541 = vpop.f32.mrb[0].mxu0
    %1542 = vdwg.mxu0
    %v1543 = vadd.f32 %v1350, %v1535
    %v1544 = vadd.f32 %v1351, %v1540
    %v1545 = vld [vmem:[%s12] sm:$0x1]
    %v1546 = vld [vmem:[%s13] sm:$0x1]
    %v1547 = vsel %vm63, %v1543, 0.0
    %1548 = vadd.xlane.f32.xlu0 %v1547
    %v1549 = vpop.xlane.xlu0 %1548
    %v1550 = vsel %vm63, %v1544, 0.0
    %1551 = vadd.xlane.f32.xlu0 %v1550
    %v1552 = vpop.xlane.xlu0 %1551
    %v1553 = vmul.f32 %v1549, %v1315
    %v1554 = vmul.f32 %v1552, %v1315
    %v1555 = vsub.f32 %v1543, %v1553
    %v1556 = vsub.f32 %v1544, %v1554
    %v1557 = vmul.f32 %v1555, %v1555
    %v1558 = vmul.f32 %v1556, %v1556
    %v1559 = vsel %vm63, %v1557, 0.0
    %1560 = vadd.xlane.f32.xlu0 %v1559
    %v1561 = vpop.xlane.xlu0 %1560
    %v1562 = vsel %vm63, %v1558, 0.0
    %1563 = vadd.xlane.f32.xlu0 %v1562
    %v1564 = vpop.xlane.xlu0 %1563
    %v1565 = vmul.f32 %v1561, %v1315
    %v1566 = vmul.f32 %v1564, %v1315
    %v1567 = vadd.f32 %v1565, 1e-05
    %v1568 = vadd.f32 %v1566, 1e-05
    %v1569 = vrsqrt.pop %v1567
    %v1570 = vrsqrt.pop %v1568
    %v1571 = vmul.f32 %v1555, %v1569
    %v1572 = vmul.f32 %v1556, %v1570
    %v1574 = vlaneseq
    %v1575 = vshrl.u32 %v1574, 7
    %v1576 = vsub.s32 0, %v1575
    %v1577 = vrot.slane %v1545, %v1576
    %v1579 = vmul.f32 %v1571, %v1577
    %v1580 = vmul.f32 %v1572, %v1577
    %v1582 = vlaneseq
    %v1583 = vshrl.u32 %v1582, 7
    %v1584 = vsub.s32 0, %v1583
    %v1585 = vrot.slane %v1546, %v1584
    %v1587 = vadd.f32 %v1579, %v1585
    %v1588 = vadd.f32 %v1580, %v1585
    %1589 = vst.msk [vmem:[#allocation2] sm:$0xff] %vm63, %v1587
    %1590 = vst.msk [vmem:[#allocation2 + $0x8] sm:$0xff] %vm63, %v1588
    // Predicated region
    $region58: #{transformer_forward.1} parent=1 // pred_check
      _
    $region59: #{transformer_forward.1} parent=1 // pred_check_branch
      %1592 = sbr.rel (0) target = $region61
    $region60: #{transformer_forward.1} parent=1 // pred_region
      %s1594 = ssub.s32 256, 256
      %1595 = vsyncadd [#allocation3], %s1594
      %s1596 = sshll.u32 [#allocation2], 4
      %s1597 = int_to_ptr.vmem [resolvable:$true] %s1596
      %1602 = dma.vmem_to_hbm [thread:$0]  %s1597, 256, %s14, [#allocation3], 128, 128, 8
    $region61: #{transformer_forward.1} parent=1 // pred_fallthru
      _
    // Predicated region
    $region62: #{transformer_forward.1} parent=1 // pred_check
      _
    $region63: #{transformer_forward.1} parent=1 // pred_check_branch
      %1604 = sbr.rel (0) target = $region65
    $region64: #{transformer_forward.1} parent=1 // pred_region
      %1605 = dma.done [#allocation3], 256
    $region65: #{transformer_forward.1} parent=1 // pred_fallthru
      _
    %1606 = vsyncpa [#allocation3], 1

</llo_original>
